<compile_context>
chip_gen: v6e
topology: v6e:2x2x1
jax: 0.10.0
libtpu: 0.0.40
codegen_flags: <defaults>
</compile_context>

<pallas_src>
import functools

import jax
import jax.numpy as jnp
from jax.experimental import pallas as pl
from jax.experimental.pallas import tpu as pltpu

# ---------------- model hyper-params (small, consistent with the module) -------
BATCH = 2
INPUT_SIZE = 4          # input channels
HIDDEN_SIZE = 32        # hidden channels
SPATIAL = 16            # H = W
KSIZE = 3               # conv kernel size (padding = KSIZE // 2)

CIN_TOT = INPUT_SIZE + HIDDEN_SIZE            # 36
PATCH_D = KSIZE * KSIZE * CIN_TOT             # 324
GATE_D = 4 * HIDDEN_SIZE                      # 128  (lane-dense on TPU)
HW = SPATIAL * SPATIAL                        # 256


def _sigmoid(x):
    # plain formulation; lowers to EUP exp + VALU ops inside Mosaic
    return 1.0 / (1.0 + jnp.exp(-x))


# --------------------------------- kernel --------------------------------------
def convlstm_kernel(patches_ref, w_ref, b_ref, c_prev_ref, h_out_ref, c_out_ref):
    # patches_ref: (1, HW, PATCH_D)   im2col patches for this batch sample
    # w_ref:       (PATCH_D, GATE_D)  packed conv weight
    # b_ref:       (1, GATE_D)        conv bias
    # c_prev_ref:  (1, HW, HIDDEN)    previous cell state (NHWC-flattened)
    p = patches_ref[0]                                   # (HW, PATCH_D)
    w = w_ref[...]
    b = b_ref[...]

    # One wide MXU push; 128-lane-dense f32 accumulation.
    gates = jnp.dot(p, w, preferred_element_type=jnp.float32) + b   # (HW, 128)

    # Gate order matches PyTorch chunk(4, dim=1): in, remember, out, cell.
    ig = _sigmoid(gates[:, 0 * HIDDEN_SIZE:1 * HIDDEN_SIZE])
    rg = _sigmoid(gates[:, 1 * HIDDEN_SIZE:2 * HIDDEN_SIZE])
    og = _sigmoid(gates[:, 2 * HIDDEN_SIZE:3 * HIDDEN_SIZE])
    cg = jnp.tanh(gates[:, 3 * HIDDEN_SIZE:4 * HIDDEN_SIZE])

    c_prev = c_prev_ref[0]                               # (HW, HIDDEN)
    c_new = rg * c_prev + ig * cg
    h_new = og * jnp.tanh(c_new)

    h_out_ref[0] = h_new
    c_out_ref[0] = c_new


# --------------------------------- wrapper -------------------------------------
def conv_lstm(input_nchw, weight, bias, prev_state=None):
    """input_nchw: (B, Cin, H, W); weight: (4*Chid, Cin+Chid, k, k); bias: (4*Chid,).
    Returns (hidden, cell), each (B, Chid, H, W) — same as the PyTorch module."""
    B, Cin, H, W = input_nchw.shape
    Chid = HIDDEN_SIZE
    pad = KSIZE // 2

    if prev_state is None:
        prev_hidden = jnp.zeros((B, Chid, H, W), jnp.float32)
        prev_cell = jnp.zeros((B, Chid, H, W), jnp.float32)
    else:
        prev_hidden, prev_cell = prev_state

    # --- wrapper-side layout plumbing (no FLOPs) --------------------------------
    x = jnp.transpose(input_nchw, (0, 2, 3, 1))          # NHWC
    h = jnp.transpose(prev_hidden, (0, 2, 3, 1))
    xh = jnp.concatenate([x, h], axis=-1)                # (B, H, W, Cin+Chid)
    xh_p = jnp.pad(xh, ((0, 0), (pad, pad), (pad, pad), (0, 0)))

    # im2col: patch channel index = (dy*K + dx) * CIN_TOT + c
    cols = [xh_p[:, dy:dy + H, dx:dx + W, :]
            for dy in range(KSIZE) for dx in range(KSIZE)]
    patches = jnp.concatenate(cols, axis=-1).reshape(B, H * W, PATCH_D)

    # (O, I, kh, kw) -> (kh, kw, I, O) -> (kh*kw*I, O): matches patch ordering
    w_mat = jnp.transpose(weight, (2, 3, 1, 0)).reshape(PATCH_D, GATE_D)
    b_mat = bias.reshape(1, GATE_D).astype(jnp.float32)

    c_prev = jnp.transpose(prev_cell, (0, 2, 3, 1)).reshape(B, H * W, Chid)

    sample_in = pl.BlockSpec((1, H * W, PATCH_D), lambda i: (i, 0, 0))
    state_spec = pl.BlockSpec((1, H * W, Chid), lambda i: (i, 0, 0))
    w_spec = pl.BlockSpec((PATCH_D, GATE_D), lambda i: (0, 0))
    b_spec = pl.BlockSpec((1, GATE_D), lambda i: (0, 0))

    h_flat, c_flat = pl.pallas_call(
        convlstm_kernel,
        out_shape=(
            jax.ShapeDtypeStruct((B, H * W, Chid), jnp.float32),
            jax.ShapeDtypeStruct((B, H * W, Chid), jnp.float32),
        ),
        grid_spec=pltpu.PrefetchScalarGridSpec(
            num_scalar_prefetch=0,
            grid=(B,),
            in_specs=[sample_in, w_spec, b_spec, state_spec],
            out_specs=(state_spec, state_spec),
        ),
        compiler_params=pltpu.CompilerParams(
            dimension_semantics=("parallel",),   # v7x: one sample per TensorCore
        ),
    )(patches, w_mat, b_mat, c_prev)

    hidden = jnp.transpose(h_flat.reshape(B, H, W, Chid), (0, 3, 1, 2))
    cell = jnp.transpose(c_flat.reshape(B, H, W, Chid), (0, 3, 1, 2))
    return hidden, cell


# ---------------- pure-JAX reference (mirrors PyTorch semantics) ---------------
def conv_lstm_reference(input_, weight, bias, prev_state=None):
    B, Cin, H, W = input_.shape
    Chid = HIDDEN_SIZE
    pad = KSIZE // 2
    if prev_state is None:
        prev_hidden = jnp.zeros((B, Chid, H, W), jnp.float32)
        prev_cell = jnp.zeros((B, Chid, H, W), jnp.float32)
    else:
        prev_hidden, prev_cell = prev_state

    stacked = jnp.concatenate([input_, prev_hidden], axis=1)
    gates = jax.lax.conv_general_dilated(
        stacked, weight, window_strides=(1, 1),
        padding=[(pad, pad), (pad, pad)],
        dimension_numbers=("NCHW", "OIHW", "NCHW"),
        precision=jax.lax.Precision.HIGHEST,
    ) + bias.reshape(1, -1, 1, 1)

    ig, rg, og, cg = jnp.split(gates, 4, axis=1)
    ig = jax.nn.sigmoid(ig)
    rg = jax.nn.sigmoid(rg)
    og = jax.nn.sigmoid(og)
    cg = jnp.tanh(cg)
    cell = rg * prev_cell + ig * cg
    hidden = og * jnp.tanh(cell)
    return hidden, cell


# ----------------------------------- main --------------------------------------
if __name__ == "__main__":
    key = jax.random.PRNGKey(0)
    k1, k2, k3, k4, k5 = jax.random.split(key, 5)

    x = jax.random.normal(k1, (BATCH, INPUT_SIZE, SPATIAL, SPATIAL), jnp.float32)
    h0 = jax.random.normal(k2, (BATCH, HIDDEN_SIZE, SPATIAL, SPATIAL), jnp.float32)
    c0 = jax.random.normal(k3, (BATCH, HIDDEN_SIZE, SPATIAL, SPATIAL), jnp.float32)
    gw = (0.05 * jax.random.normal(k4, (GATE_D, CIN_TOT, KSIZE, KSIZE))).astype(jnp.float32)
    gb = (0.05 * jax.random.normal(k5, (GATE_D,))).astype(jnp.float32)

    # General path: explicit prev_state (exercises the full LSTM update).
    hidden, cell = conv_lstm(x, gw, gb, prev_state=(h0, c0))
    hidden, cell = jax.block_until_ready((hidden, cell))

    h_ref, c_ref = conv_lstm_reference(x, gw, gb, prev_state=(h0, c0))
    assert hidden.shape == (BATCH, HIDDEN_SIZE, SPATIAL, SPATIAL)
    assert cell.shape == (BATCH, HIDDEN_SIZE, SPATIAL, SPATIAL)
    assert jnp.allclose(hidden, h_ref, atol=1e-4, rtol=1e-4), "hidden mismatch vs reference"
    assert jnp.allclose(cell, c_ref, atol=1e-4, rtol=1e-4), "cell mismatch vs reference"

    # Default path: prev_state=None -> zero initial state (as in the PyTorch module).
    h2, c2 = conv_lstm(x, gw, gb, prev_state=None)
    h2, c2 = jax.block_until_ready((h2, c2))
    h2_ref, c2_ref = conv_lstm_reference(x, gw, gb, prev_state=None)
    assert jnp.allclose(h2, h2_ref, atol=1e-4, rtol=1e-4), "hidden (zero-state) mismatch"
    assert jnp.allclose(c2, c2_ref, atol=1e-4, rtol=1e-4), "cell (zero-state) mismatch"

    print("KERNEL_OK")
</pallas_src>

<mosaic_0001>
module attributes {stable_mosaic.version = 11 : i64} {
  func.func @convlstm_kernel(%arg0: i32, %arg1: memref<1x256x324xf32, #tpu.memory_space<vmem>>, %arg2: memref<324x128xf32, #tpu.memory_space<vmem>>, %arg3: memref<1x128xf32, #tpu.memory_space<vmem>>, %arg4: memref<1x256x32xf32, #tpu.memory_space<vmem>>, %arg5: memref<1x256x32xf32, #tpu.memory_space<vmem>>, %arg6: memref<1x256x32xf32, #tpu.memory_space<vmem>>) attributes {dimension_semantics = [#tpu.dimension_semantics<parallel>], iteration_bounds = array<i64: 2>, scalar_prefetch = 0 : i64, scratch_operands = 0 : i64, tpu.core_type = #tpu.core_type<tc>, window_params = [{transform_indices = @transform_0, window_bounds = array<i64: 1, 256, 324>}, {pipeline_mode = #tpu.pipeline_mode<synchronous>, transform_indices = @transform_1, window_bounds = array<i64: 324, 128>}, {pipeline_mode = #tpu.pipeline_mode<synchronous>, transform_indices = @transform_2, window_bounds = array<i64: 1, 128>}, {transform_indices = @transform_3, window_bounds = array<i64: 1, 256, 32>}, {transform_indices = @transform_4, window_bounds = array<i64: 1, 256, 32>}, {transform_indices = @transform_5, window_bounds = array<i64: 1, 256, 32>}]} {
    %c0 = arith.constant 0 : index
    %c0_0 = arith.constant 0 : index
    %c0_1 = arith.constant 0 : index
    %0 = vector.load %arg1[%c0, %c0_0, %c0_1] : memref<1x256x324xf32, #tpu.memory_space<vmem>>, vector<1x256x324xf32>
    %1 = vector.shape_cast %0 : vector<1x256x324xf32> to vector<256x324xf32>
    %c0_2 = arith.constant 0 : index
    %c0_3 = arith.constant 0 : index
    %2 = vector.load %arg2[%c0_2, %c0_3] : memref<324x128xf32, #tpu.memory_space<vmem>>, vector<324x128xf32>
    %c0_4 = arith.constant 0 : index
    %c0_5 = arith.constant 0 : index
    %3 = vector.load %arg3[%c0_4, %c0_5] : memref<1x128xf32, #tpu.memory_space<vmem>>, vector<1x128xf32>
    %cst = arith.constant dense<0.000000e+00> : vector<256x128xf32>
    %4 = tpu.matmul %1, %2, %cst {dimension_numbers = #tpu.dot_dimension_numbers<[1], [0], [0], [1], [0, 0, 1, 1], [], []>} : vector<256x324xf32>, vector<324x128xf32>, vector<256x128xf32> -> vector<256x128xf32>
    %5 = vector.broadcast %3 : vector<1x128xf32> to vector<256x128xf32>
    %6 = arith.addf %4, %5 : vector<256x128xf32>
    %7 = vector.extract_strided_slice %6 {offsets = [0, 0], sizes = [256, 32], strides = [1, 1]} : vector<256x128xf32> to vector<256x32xf32>
    %cst_6 = arith.constant 0.000000e+00 : f32
    %8 = vector.broadcast %cst_6 : f32 to vector<256x32xf32>
    %9 = arith.subf %8, %7 : vector<256x32xf32>
    %10 = math.exp %9 : vector<256x32xf32>
    %cst_7 = arith.constant 1.000000e+00 : f32
    %11 = vector.broadcast %cst_7 : f32 to vector<256x32xf32>
    %12 = arith.addf %11, %10 : vector<256x32xf32>
    %cst_8 = arith.constant 1.000000e+00 : f32
    %13 = vector.broadcast %cst_8 : f32 to vector<256x32xf32>
    %14 = arith.divf %13, %12 : vector<256x32xf32>
    %15 = vector.extract_strided_slice %6 {offsets = [0, 32], sizes = [256, 32], strides = [1, 1]} : vector<256x128xf32> to vector<256x32xf32>
    %cst_9 = arith.constant 0.000000e+00 : f32
    %16 = vector.broadcast %cst_9 : f32 to vector<256x32xf32>
    %17 = arith.subf %16, %15 : vector<256x32xf32>
    %18 = math.exp %17 : vector<256x32xf32>
    %cst_10 = arith.constant 1.000000e+00 : f32
    %19 = vector.broadcast %cst_10 : f32 to vector<256x32xf32>
    %20 = arith.addf %19, %18 : vector<256x32xf32>
    %cst_11 = arith.constant 1.000000e+00 : f32
    %21 = vector.broadcast %cst_11 : f32 to vector<256x32xf32>
    %22 = arith.divf %21, %20 : vector<256x32xf32>
    %23 = vector.extract_strided_slice %6 {offsets = [0, 64], sizes = [256, 32], strides = [1, 1]} : vector<256x128xf32> to vector<256x32xf32>
    %cst_12 = arith.constant 0.000000e+00 : f32
    %24 = vector.broadcast %cst_12 : f32 to vector<256x32xf32>
    %25 = arith.subf %24, %23 : vector<256x32xf32>
    %26 = math.exp %25 : vector<256x32xf32>
    %cst_13 = arith.constant 1.000000e+00 : f32
    %27 = vector.broadcast %cst_13 : f32 to vector<256x32xf32>
    %28 = arith.addf %27, %26 : vector<256x32xf32>
    %cst_14 = arith.constant 1.000000e+00 : f32
    %29 = vector.broadcast %cst_14 : f32 to vector<256x32xf32>
    %30 = arith.divf %29, %28 : vector<256x32xf32>
    %31 = vector.extract_strided_slice %6 {offsets = [0, 96], sizes = [256, 32], strides = [1, 1]} : vector<256x128xf32> to vector<256x32xf32>
    %32 = math.tanh %31 : vector<256x32xf32>
    %c0_15 = arith.constant 0 : index
    %c0_16 = arith.constant 0 : index
    %c0_17 = arith.constant 0 : index
    %33 = vector.load %arg4[%c0_15, %c0_16, %c0_17] : memref<1x256x32xf32, #tpu.memory_space<vmem>>, vector<1x256x32xf32>
    %34 = vector.shape_cast %33 : vector<1x256x32xf32> to vector<256x32xf32>
    %35 = arith.mulf %22, %34 : vector<256x32xf32>
    %36 = arith.mulf %14, %32 : vector<256x32xf32>
    %37 = arith.addf %35, %36 : vector<256x32xf32>
    %38 = math.tanh %37 : vector<256x32xf32>
    %39 = arith.mulf %30, %38 : vector<256x32xf32>
    %c0_18 = arith.constant 0 : index
    %c0_19 = arith.constant 0 : index
    %c0_20 = arith.constant 0 : index
    %40 = vector.load %arg5[%c0_18, %c0_19, %c0_20] : memref<1x256x32xf32, #tpu.memory_space<vmem>>, vector<1x256x32xf32>
    %41 = vector.shape_cast %40 : vector<1x256x32xf32> to vector<256x32xf32>
    %42 = vector.shape_cast %39 : vector<256x32xf32> to vector<1x256x32xf32>
    tpu.vector_store %arg5[%c0_18, %c0_19, %c0_20], %42 {strides = array<i32>} : memref<1x256x32xf32, #tpu.memory_space<vmem>>, vector<1x256x32xf32>,
    %c0_21 = arith.constant 0 : index
    %c0_22 = arith.constant 0 : index
    %c0_23 = arith.constant 0 : index
    %43 = vector.load %arg6[%c0_21, %c0_22, %c0_23] : memref<1x256x32xf32, #tpu.memory_space<vmem>>, vector<1x256x32xf32>
    %44 = vector.shape_cast %43 : vector<1x256x32xf32> to vector<256x32xf32>
    %45 = vector.shape_cast %37 : vector<256x32xf32> to vector<1x256x32xf32>
    tpu.vector_store %arg6[%c0_21, %c0_22, %c0_23], %45 {strides = array<i32>} : memref<1x256x32xf32, #tpu.memory_space<vmem>>, vector<1x256x32xf32>,
    return
  }
  func.func @transform_0(%arg0: i32) -> (i32, i32, i32) {
    %c0_i32 = arith.constant 0 : i32
    %c0_i32_0 = arith.constant 0 : i32
    %c0_i32_1 = arith.constant 0 : i32
    return %arg0, %c0_i32, %c0_i32_0 : i32, i32, i32
  }
  func.func @transform_1(%arg0: i32) -> (i32, i32) {
    %c0_i32 = arith.constant 0 : i32
    %c0_i32_0 = arith.constant 0 : i32
    %c0_i32_1 = arith.constant 0 : i32
    return %c0_i32, %c0_i32_0 : i32, i32
  }
  func.func @transform_2(%arg0: i32) -> (i32, i32) {
    %c0_i32 = arith.constant 0 : i32
    %c0_i32_0 = arith.constant 0 : i32
    %c0_i32_1 = arith.constant 0 : i32
    return %c0_i32, %c0_i32_0 : i32, i32
  }
  func.func @transform_3(%arg0: i32) -> (i32, i32, i32) {
    %c0_i32 = arith.constant 0 : i32
    %c0_i32_0 = arith.constant 0 : i32
    %c0_i32_1 = arith.constant 0 : i32
    return %arg0, %c0_i32, %c0_i32_0 : i32, i32, i32
  }
  func.func @transform_4(%arg0: i32) -> (i32, i32, i32) {
    %c0_i32 = arith.constant 0 : i32
    %c0_i32_0 = arith.constant 0 : i32
    %c0_i32_1 = arith.constant 0 : i32
    return %arg0, %c0_i32, %c0_i32_0 : i32, i32, i32
  }
  func.func @transform_5(%arg0: i32) -> (i32, i32, i32) {
    %c0_i32 = arith.constant 0 : i32
    %c0_i32_0 = arith.constant 0 : i32
    %c0_i32_1 = arith.constant 0 : i32
    return %arg0, %c0_i32, %c0_i32_0 : i32, i32, i32
  }
}

</mosaic_0001>

<llo_original>
// kernel: tpu_custom_call.1
$region0: #{tpu_custom_call.1}
  #allocation0 [shape = 'u32[]', space=smem, size = 0x4, offset = 0x4, fixed_abs, tag = 'smem constant byte address 0x4 - core index']
  #allocation1 [shape = 'u32[144,128]{1,0:T(1,128)}', space=vmem, size = 0x12000, scoped, tag = 'internal scratch']
  %s0 = inlined_call_operand.vmem [shape: f32[2,256,324], index: 0, kind: input, shape index: {}]
  %s1 = inlined_call_operand.vmem [shape: f32[324,128], index: 1, kind: input, shape index: {}]
  %s2 = inlined_call_operand.vmem [shape: f32[1,128], index: 2, kind: input, shape index: {}]
  %s3 = inlined_call_operand.vmem [shape: f32[2,256,32], index: 3, kind: input, shape index: {}]
  %s4 = inlined_call_operand.vmem [shape: f32[2,256,32], index: 4, kind: output, shape index: {0}]
  %s5 = inlined_call_operand.vmem [shape: f32[2,256,32], index: 5, kind: output, shape index: {1}]
  %6 = xla_tuple %s4, %s5
  %s7 = sld [smem:[#allocation0]]
  $region57: #{tpu_custom_call.1} parent=0
    _
  %s9 = ssub.s32 1, %s7
  %s10 = scalar_select 0, %s9, %s7
  loop: start=0, step=1, limit=4
  $region2: #{tpu_custom_call.1} parent=0 // loop_pre_header
    _
  $region3: #{tpu_custom_call.1} parent=0 // loop_header
    %s12 = sphi 0, %s16
    %p13 = scmp.ge.s32.totalorder %s12, 4
    %s22 = sphi 0, %s24
    %s25 = sphi 0, %s22
    %s26 = sphi 0, %s25
    %s42 = sphi 0, %s26
    %s46 = sphi 0, %s46
    %s48 = sphi 0, %s46
    %s49 = sphi 0, %s48
    %s63 = sphi 0, %s49
    %s67 = sphi 0, %s67
    %s69 = sphi 0, %s67
    %s70 = sphi 0, %s69
    %s84 = sphi 0, %s70
    %s90 = sphi 0, %s92
    %s93 = sphi 0, %s90
    %s94 = sphi 0, %s93
    %s110 = sphi 0, %s94
    %s116 = sphi 0, %s118
    %s119 = sphi 0, %s116
    %s120 = sphi 0, %s119
    %s136 = sphi 0, %s120
    %s142 = sphi 0, %s144
    %s145 = sphi 0, %s142
    %s146 = sphi 0, %s145
    %s162 = sphi 0, %s146
  $region4: #{tpu_custom_call.1} parent=0 // loop_header_branch
    %15 = sbr.rel (%p13) target = $region8
  $region5: #{tpu_custom_call.1} parent=0 // loop_body
    %s17 = ssub.s32 %s12, 1
    %s18 = ssub.s32 %s12, 2
    %s19 = sadd.s32 %s12, 1
    %s20 = ssub.s32 %s12, %s19
    %p21 = scmp.eq.s32.totalorder %s20, 0
    %s23 = sadd.s32 %s22, 1
    %s24 = scalar_select %p21, %s22, %s23
    %p27 = pneg %p21
    %p28 = scmp.eq.s32.totalorder %s12, 1
    %p29 = por %p27, %p28
    %p30 = scmp.ne.s32.totalorder %s22, %s25
    %p31 = scmp.eq.s32.totalorder %s12, 0
    %p32 = por %p30, %p31
    %p33 = scmp.ne.s32.totalorder %s22, %s25
    %p34 = scmp.eq.s32.totalorder %s17, 1
    %p35 = por %p33, %p34
    %p36 = scmp.ne.s32.totalorder %s25, %s26
    %p37 = scmp.eq.s32.totalorder %s17, 0
    %p38 = por %p36, %p37
    %p39 = scmp.ne.s32.totalorder %s25, %s26
    %p40 = scmp.eq.s32.totalorder %s18, 1
    %p41 = por %p39, %p40
    %p43 = scmp.ne.s32.totalorder %s26, %s42
    %p44 = scmp.eq.s32.totalorder %s18, 0
    %p45 = por %p43, %p44
    %s47 = sadd.s32 %s46, 1
    %p50 = scmp.eq.s32.totalorder %s12, 1
    %p51 = scmp.ne.s32.totalorder %s46, %s48
    %p52 = scmp.eq.s32.totalorder %s12, 0
    %p53 = por %p51, %p52
    %p54 = scmp.ne.s32.totalorder %s46, %s48
    %p55 = scmp.eq.s32.totalorder %s17, 1
    %p56 = por %p54, %p55
    %p57 = scmp.ne.s32.totalorder %s48, %s49
    %p58 = scmp.eq.s32.totalorder %s17, 0
    %p59 = por %p57, %p58
    %p60 = scmp.ne.s32.totalorder %s48, %s49
    %p61 = scmp.eq.s32.totalorder %s18, 1
    %p62 = por %p60, %p61
    %p64 = scmp.ne.s32.totalorder %s49, %s63
    %p65 = scmp.eq.s32.totalorder %s18, 0
    %p66 = por %p64, %p65
    %s68 = sadd.s32 %s67, 1
    %p71 = scmp.eq.s32.totalorder %s12, 1
    %p72 = scmp.ne.s32.totalorder %s67, %s69
    %p73 = scmp.eq.s32.totalorder %s12, 0
    %p74 = por %p72, %p73
    %p75 = scmp.ne.s32.totalorder %s67, %s69
    %p76 = scmp.eq.s32.totalorder %s17, 1
    %p77 = por %p75, %p76
    %p78 = scmp.ne.s32.totalorder %s69, %s70
    %p79 = scmp.eq.s32.totalorder %s17, 0
    %p80 = por %p78, %p79
    %p81 = scmp.ne.s32.totalorder %s69, %s70
    %p82 = scmp.eq.s32.totalorder %s18, 1
    %p83 = por %p81, %p82
    %p85 = scmp.ne.s32.totalorder %s70, %s84
    %p86 = scmp.eq.s32.totalorder %s18, 0
    %p87 = por %p85, %p86
    %s88 = ssub.s32 %s12, %s19
    %p89 = scmp.eq.s32.totalorder %s88, 0
    %s91 = sadd.s32 %s90, 1
    %s92 = scalar_select %p89, %s90, %s91
    %p95 = pneg %p89
    %p96 = scmp.eq.s32.totalorder %s12, 1
    %p97 = por %p95, %p96
    %p98 = scmp.ne.s32.totalorder %s90, %s93
    %p99 = scmp.eq.s32.totalorder %s12, 0
    %p100 = por %p98, %p99
    %p101 = scmp.ne.s32.totalorder %s90, %s93
    %p102 = scmp.eq.s32.totalorder %s17, 1
    %p103 = por %p101, %p102
    %p104 = scmp.ne.s32.totalorder %s93, %s94
    %p105 = scmp.eq.s32.totalorder %s17, 0
    %p106 = por %p104, %p105
    %p107 = scmp.ne.s32.totalorder %s93, %s94
    %p108 = scmp.eq.s32.totalorder %s18, 1
    %p109 = por %p107, %p108
    %p111 = scmp.ne.s32.totalorder %s94, %s110
    %p112 = scmp.eq.s32.totalorder %s18, 0
    %p113 = por %p111, %p112
    %s114 = ssub.s32 %s12, %s19
    %p115 = scmp.eq.s32.totalorder %s114, 0
    %s117 = sadd.s32 %s116, 1
    %s118 = scalar_select %p115, %s116, %s117
    %p121 = pneg %p115
    %p122 = scmp.eq.s32.totalorder %s12, 1
    %p123 = por %p121, %p122
    %p124 = scmp.ne.s32.totalorder %s116, %s119
    %p125 = scmp.eq.s32.totalorder %s12, 0
    %p126 = por %p124, %p125
    %p127 = scmp.ne.s32.totalorder %s116, %s119
    %p128 = scmp.eq.s32.totalorder %s17, 1
    %p129 = por %p127, %p128
    %p130 = scmp.ne.s32.totalorder %s119, %s120
    %p131 = scmp.eq.s32.totalorder %s17, 0
    %p132 = por %p130, %p131
    %p133 = scmp.ne.s32.totalorder %s119, %s120
    %p134 = scmp.eq.s32.totalorder %s18, 1
    %p135 = por %p133, %p134
    %p137 = scmp.ne.s32.totalorder %s120, %s136
    %p138 = scmp.eq.s32.totalorder %s18, 0
    %p139 = por %p137, %p138
    %s140 = ssub.s32 %s12, %s19
    %p141 = scmp.eq.s32.totalorder %s140, 0
    %s143 = sadd.s32 %s142, 1
    %s144 = scalar_select %p141, %s142, %s143
    %p147 = pneg %p141
    %p148 = scmp.eq.s32.totalorder %s12, 1
    %p149 = por %p147, %p148
    %p150 = scmp.ne.s32.totalorder %s142, %s145
    %p151 = scmp.eq.s32.totalorder %s12, 0
    %p152 = por %p150, %p151
    %p153 = scmp.ne.s32.totalorder %s142, %s145
    %p154 = scmp.eq.s32.totalorder %s17, 1
    %p155 = por %p153, %p154
    %p156 = scmp.ne.s32.totalorder %s145, %s146
    %p157 = scmp.eq.s32.totalorder %s17, 0
    %p158 = por %p156, %p157
    %p159 = scmp.ne.s32.totalorder %s145, %s146
    %p160 = scmp.eq.s32.totalorder %s18, 1
    %p161 = por %p159, %p160
    %p163 = scmp.ne.s32.totalorder %s146, %s162
    %p164 = scmp.eq.s32.totalorder %s18, 0
    %p165 = por %p163, %p164
    %p166 = scmp.le.s32.totalorder 1, %s12
    %p167 = scmp.lt.s32.totalorder %s12, 3
    %p168 = pnand %p166, %p167
    %p169 = pneg %p168
    // Predicated region
    $region9: #{tpu_custom_call.1} parent=5 // pred_check
      _
    $region10: #{tpu_custom_call.1} parent=5 // pred_check_branch
      %171 = sbr.rel (%p168) target = $region12
    $region11: #{tpu_custom_call.1} parent=5 // pred_region
      %s172 = ssub.s32 %s12, 1
      // Predicated region
      $region13: #{tpu_custom_call.1} parent=11 // pred_check
        %p173 = pneg %p59
      $region14: #{tpu_custom_call.1} parent=11 // pred_check_branch
        %175 = sbr.rel (%p173) target = $region16
      $region15: #{tpu_custom_call.1} parent=11 // pred_region
        _
      $region16: #{tpu_custom_call.1} parent=11 // pred_fallthru
        _
      // Predicated region
      $region17: #{tpu_custom_call.1} parent=11 // pred_check
        %p176 = pneg %p80
      $region18: #{tpu_custom_call.1} parent=11 // pred_check_branch
        %178 = sbr.rel (%p176) target = $region20
      $region19: #{tpu_custom_call.1} parent=11 // pred_region
        _
      $region20: #{tpu_custom_call.1} parent=11 // pred_fallthru
        _
    $region12: #{tpu_custom_call.1} parent=5 // pred_fallthru
      _
    %p179 = scmp.lt.s32.totalorder %s12, 2
    // Predicated region
    $region21: #{tpu_custom_call.1} parent=5 // pred_check
      %p180 = pneg %p179
    $region22: #{tpu_custom_call.1} parent=5 // pred_check_branch
      %182 = sbr.rel (%p180) target = $region24
    $region23: #{tpu_custom_call.1} parent=5 // pred_region
      // Predicated region
      $region25: #{tpu_custom_call.1} parent=23 // pred_check
        %p183 = pneg %p32
      $region26: #{tpu_custom_call.1} parent=23 // pred_check_branch
        %185 = sbr.rel (%p183) target = $region28
      $region27: #{tpu_custom_call.1} parent=23 // pred_region
        %p186 = scmp.lt.s32.totalorder %s12, 1
        %s187 = scalar_select %p186, %s12, 1
        %s188 = smul.addr %s187, 96
        %s189 = smul.addr %s188, 8
        %s190 = scalar_lea.vmem %s0, %s189
      $region28: #{tpu_custom_call.1} parent=23 // pred_fallthru
        _
      // Predicated region
      $region29: #{tpu_custom_call.1} parent=23 // pred_check
        %p191 = pneg %p100
      $region30: #{tpu_custom_call.1} parent=23 // pred_check_branch
        %193 = sbr.rel (%p191) target = $region32
      $region31: #{tpu_custom_call.1} parent=23 // pred_region
        %p194 = scmp.lt.s32.totalorder %s12, 1
        %s195 = scalar_select %p194, %s12, 1
        %s196 = smul.addr %s195, 32
        %s197 = smul.addr %s196, 8
        %s198 = scalar_lea.vmem %s3, %s197
      $region32: #{tpu_custom_call.1} parent=23 // pred_fallthru
        _
    $region24: #{tpu_custom_call.1} parent=5 // pred_fallthru
      _
    %p199 = scmp.le.s32.totalorder 1, %s12
    %p200 = scmp.lt.s32.totalorder %s12, 3
    %p201 = pnand %p199, %p200
    %p202 = pneg %p201
    // Predicated region
    $region33: #{tpu_custom_call.1} parent=5 // pred_check
      _
    $region34: #{tpu_custom_call.1} parent=5 // pred_check_branch
      %204 = sbr.rel (%p201) target = $region36
    $region35: #{tpu_custom_call.1} parent=5 // pred_region
      %s205 = ssub.s32 %s12, 1
      %p206 = scmp.lt.s32.totalorder %s17, 1
      %s207 = scalar_select %p206, %s17, 1
      %s208 = smul.addr %s207, 96
      %s209 = smul.addr %s208, 8
      %s210 = scalar_lea.vmem %s0, %s209
      %p211 = pneg %p38
      %p212 = pneg %p35
      %p213 = pneg %p59
      %p214 = pneg %p56
      %p215 = pneg %p80
      %p216 = pneg %p77
      %p217 = scmp.lt.s32.totalorder %s17, 1
      %s218 = scalar_select %p217, %s17, 1
      %s219 = smul.addr %s218, 32
      %s220 = smul.addr %s219, 8
      %s221 = scalar_lea.vmem %s3, %s220
      %p222 = pneg %p106
      %p223 = pneg %p103
      %p224 = pneg %p132
      %p225 = pneg %p129
      %p226 = scmp.lt.s32.totalorder %s17, 1
      %s227 = scalar_select %p226, %s17, 1
      %s228 = smul.addr %s227, 32
      %s229 = smul.addr %s228, 8
      %s230 = scalar_lea.vmem %s4, %s229
      %p231 = pneg %p158
      %p232 = pneg %p155
      %p233 = scmp.lt.s32.totalorder %s17, 1
      %s234 = scalar_select %p233, %s17, 1
      %s235 = smul.addr %s234, 32
      %s236 = smul.addr %s235, 8
      %s237 = scalar_lea.vmem %s5, %s236
      %p238 = scmp.lt.s32.totalorder %s17, 1
      %s239 = scalar_select %p238, %s17, 1
      %s240 = smul.addr %s239, 96
      %s241 = smul.addr %s240, 8
      %s242 = scalar_lea.vmem %s0, %s241
      %p243 = scmp.lt.s32.totalorder %s17, 1
      %s244 = scalar_select %p243, %s17, 1
      %s245 = smul.addr %s244, 32
      %s246 = smul.addr %s245, 8
      %s247 = scalar_lea.vmem %s3, %s246
      %p248 = scmp.lt.s32.totalorder %s17, 1
      %s249 = scalar_select %p248, %s17, 1
      %s250 = smul.addr %s249, 32
      %s251 = smul.addr %s250, 8
      %s252 = scalar_lea.vmem %s4, %s251
      %p253 = scmp.lt.s32.totalorder %s17, 1
      %s254 = scalar_select %p253, %s17, 1
      %s255 = smul.addr %s254, 32
      %s256 = smul.addr %s255, 8
      %s257 = scalar_lea.vmem %s5, %s256
      %v258 = vld [vmem:[%s242] sm:$0xff]
      %v259 = vld [vmem:[%s242 + $0x8] sm:$0xff]
      %v260 = vld [vmem:[%s242 + $0x10] sm:$0xff]
      %v261 = vld [vmem:[%s242 + $0x18] sm:$0xff]
      %v262 = vld [vmem:[%s242 + $0x20] sm:$0xff]
      %v263 = vld [vmem:[%s242 + $0x28] sm:$0xff]
      %v264 = vld [vmem:[%s242 + $0x30] sm:$0xff]
      %v265 = vld [vmem:[%s242 + $0x38] sm:$0xff]
      %v266 = vld [vmem:[%s242 + $0x40] sm:$0xff]
      %v267 = vld [vmem:[%s242 + $0x48] sm:$0xff]
      %v268 = vld [vmem:[%s242 + $0x50] sm:$0xff]
      %v269 = vld [vmem:[%s242 + $0x58] sm:$0xff]
      %v270 = vld [vmem:[%s242 + $0x60] sm:$0xff]
      %v271 = vld [vmem:[%s242 + $0x68] sm:$0xff]
      %v272 = vld [vmem:[%s242 + $0x70] sm:$0xff]
      %v273 = vld [vmem:[%s242 + $0x78] sm:$0xff]
      %v274 = vld [vmem:[%s242 + $0x80] sm:$0xff]
      %v275 = vld [vmem:[%s242 + $0x88] sm:$0xff]
      %v276 = vld [vmem:[%s242 + $0x90] sm:$0xff]
      %v277 = vld [vmem:[%s242 + $0x98] sm:$0xff]
      %v278 = vld [vmem:[%s242 + $0xa0] sm:$0xff]
      %v279 = vld [vmem:[%s242 + $0xa8] sm:$0xff]
      %v280 = vld [vmem:[%s242 + $0xb0] sm:$0xff]
      %v281 = vld [vmem:[%s242 + $0xb8] sm:$0xff]
      %v282 = vld [vmem:[%s242 + $0xc0] sm:$0xff]
      %v283 = vld [vmem:[%s242 + $0xc8] sm:$0xff]
      %v284 = vld [vmem:[%s242 + $0xd0] sm:$0xff]
      %v285 = vld [vmem:[%s242 + $0xd8] sm:$0xff]
      %v286 = vld [vmem:[%s242 + $0xe0] sm:$0xff]
      %v287 = vld [vmem:[%s242 + $0xe8] sm:$0xff]
      %v288 = vld [vmem:[%s242 + $0xf0] sm:$0xff]
      %v289 = vld [vmem:[%s242 + $0xf8] sm:$0xff]
      %v290 = vld [vmem:[%s242 + $0x100] sm:$0xff]
      %v291 = vld [vmem:[%s242 + $0x108] sm:$0xff]
      %v292 = vld [vmem:[%s242 + $0x110] sm:$0xff]
      %v293 = vld [vmem:[%s242 + $0x118] sm:$0xff]
      %v294 = vld [vmem:[%s242 + $0x120] sm:$0xff]
      %v295 = vld [vmem:[%s242 + $0x128] sm:$0xff]
      %v296 = vld [vmem:[%s242 + $0x130] sm:$0xff]
      %v297 = vld [vmem:[%s242 + $0x138] sm:$0xff]
      %v298 = vld [vmem:[%s242 + $0x140] sm:$0xff]
      %v299 = vld [vmem:[%s242 + $0x148] sm:$0xff]
      %v300 = vld [vmem:[%s242 + $0x150] sm:$0xff]
      %v301 = vld [vmem:[%s242 + $0x158] sm:$0xff]
      %v302 = vld [vmem:[%s242 + $0x160] sm:$0xff]
      %v303 = vld [vmem:[%s242 + $0x168] sm:$0xff]
      %v304 = vld [vmem:[%s242 + $0x170] sm:$0xff]
      %v305 = vld [vmem:[%s242 + $0x178] sm:$0xff]
      %v306 = vld [vmem:[%s242 + $0x180] sm:$0xff]
      %v307 = vld [vmem:[%s242 + $0x188] sm:$0xff]
      %v308 = vld [vmem:[%s242 + $0x190] sm:$0xff]
      %v309 = vld [vmem:[%s242 + $0x198] sm:$0xff]
      %v310 = vld [vmem:[%s242 + $0x1a0] sm:$0xff]
      %v311 = vld [vmem:[%s242 + $0x1a8] sm:$0xff]
      %v312 = vld [vmem:[%s242 + $0x1b0] sm:$0xff]
      %v313 = vld [vmem:[%s242 + $0x1b8] sm:$0xff]
      %v314 = vld [vmem:[%s242 + $0x1c0] sm:$0xff]
      %v315 = vld [vmem:[%s242 + $0x1c8] sm:$0xff]
      %v316 = vld [vmem:[%s242 + $0x1d0] sm:$0xff]
      %v317 = vld [vmem:[%s242 + $0x1d8] sm:$0xff]
      %v318 = vld [vmem:[%s242 + $0x1e0] sm:$0xff]
      %v319 = vld [vmem:[%s242 + $0x1e8] sm:$0xff]
      %v320 = vld [vmem:[%s242 + $0x1f0] sm:$0xff]
      %v321 = vld [vmem:[%s242 + $0x1f8] sm:$0xff]
      %v322 = vld [vmem:[%s242 + $0x200] sm:$0xff]
      %v323 = vld [vmem:[%s242 + $0x208] sm:$0xff]
      %v324 = vld [vmem:[%s242 + $0x210] sm:$0xff]
      %v325 = vld [vmem:[%s242 + $0x218] sm:$0xff]
      %v326 = vld [vmem:[%s242 + $0x220] sm:$0xff]
      %v327 = vld [vmem:[%s242 + $0x228] sm:$0xff]
      %v328 = vld [vmem:[%s242 + $0x230] sm:$0xff]
      %v329 = vld [vmem:[%s242 + $0x238] sm:$0xff]
      %v330 = vld [vmem:[%s242 + $0x240] sm:$0xff]
      %v331 = vld [vmem:[%s242 + $0x248] sm:$0xff]
      %v332 = vld [vmem:[%s242 + $0x250] sm:$0xff]
      %v333 = vld [vmem:[%s242 + $0x258] sm:$0xff]
      %v334 = vld [vmem:[%s242 + $0x260] sm:$0xff]
      %v335 = vld [vmem:[%s242 + $0x268] sm:$0xff]
      %v336 = vld [vmem:[%s242 + $0x270] sm:$0xff]
      %v337 = vld [vmem:[%s242 + $0x278] sm:$0xff]
      %v338 = vld [vmem:[%s242 + $0x280] sm:$0xff]
      %v339 = vld [vmem:[%s242 + $0x288] sm:$0xff]
      %v340 = vld [vmem:[%s242 + $0x290] sm:$0xff]
      %v341 = vld [vmem:[%s242 + $0x298] sm:$0xff]
      %v342 = vld [vmem:[%s242 + $0x2a0] sm:$0xff]
      %v343 = vld [vmem:[%s242 + $0x2a8] sm:$0xff]
      %v344 = vld [vmem:[%s242 + $0x2b0] sm:$0xff]
      %v345 = vld [vmem:[%s242 + $0x2b8] sm:$0xff]
      %v346 = vld [vmem:[%s242 + $0x2c0] sm:$0xff]
      %v347 = vld [vmem:[%s242 + $0x2c8] sm:$0xff]
      %v348 = vld [vmem:[%s242 + $0x2d0] sm:$0xff]
      %v349 = vld [vmem:[%s242 + $0x2d8] sm:$0xff]
      %v350 = vld [vmem:[%s242 + $0x2e0] sm:$0xff]
      %v351 = vld [vmem:[%s242 + $0x2e8] sm:$0xff]
      %v352 = vld [vmem:[%s242 + $0x2f0] sm:$0xff]
      %v353 = vld [vmem:[%s242 + $0x2f8] sm:$0xff]
      %v354 = vld [vmem:[%s1] sm:$0xff]
      %v355 = vld [vmem:[%s1 + $0x8] sm:$0xff]
      %v356 = vld [vmem:[%s1 + $0x10] sm:$0xff]
      %v357 = vld [vmem:[%s1 + $0x18] sm:$0xff]
      %v358 = vld [vmem:[%s1 + $0x20] sm:$0xff]
      %v359 = vld [vmem:[%s1 + $0x28] sm:$0xff]
      %v360 = vld [vmem:[%s1 + $0x30] sm:$0xff]
      %v361 = vld [vmem:[%s1 + $0x38] sm:$0xff]
      %v362 = vld [vmem:[%s1 + $0x40] sm:$0xff]
      %v363 = vld [vmem:[%s1 + $0x48] sm:$0xff]
      %v364 = vld [vmem:[%s1 + $0x50] sm:$0xff]
      %v365 = vld [vmem:[%s1 + $0x58] sm:$0xff]
      %v366 = vld [vmem:[%s1 + $0x60] sm:$0xff]
      %v367 = vld [vmem:[%s1 + $0x68] sm:$0xff]
      %v368 = vld [vmem:[%s1 + $0x70] sm:$0xff]
      %v369 = vld [vmem:[%s1 + $0x78] sm:$0xff]
      %v370 = vld [vmem:[%s1 + $0x80] sm:$0xff]
      %v371 = vld [vmem:[%s1 + $0x88] sm:$0xff]
      %v372 = vld [vmem:[%s1 + $0x90] sm:$0xff]
      %v373 = vld [vmem:[%s1 + $0x98] sm:$0xff]
      %v374 = vld [vmem:[%s1 + $0xa0] sm:$0xff]
      %v375 = vld [vmem:[%s1 + $0xa8] sm:$0xff]
      %v376 = vld [vmem:[%s1 + $0xb0] sm:$0xff]
      %v377 = vld [vmem:[%s1 + $0xb8] sm:$0xff]
      %v378 = vld [vmem:[%s1 + $0xc0] sm:$0xff]
      %v379 = vld [vmem:[%s1 + $0xc8] sm:$0xff]
      %v380 = vld [vmem:[%s1 + $0xd0] sm:$0xff]
      %v381 = vld [vmem:[%s1 + $0xd8] sm:$0xff]
      %v382 = vld [vmem:[%s1 + $0xe0] sm:$0xff]
      %v383 = vld [vmem:[%s1 + $0xe8] sm:$0xff]
      %v384 = vld [vmem:[%s1 + $0xf0] sm:$0xff]
      %v385 = vld [vmem:[%s1 + $0xf8] sm:$0xff]
      %v386 = vld [vmem:[%s1 + $0x100] sm:$0xff]
      %v387 = vld [vmem:[%s1 + $0x108] sm:$0xff]
      %v388 = vld [vmem:[%s1 + $0x110] sm:$0xff]
      %v389 = vld [vmem:[%s1 + $0x118] sm:$0xff]
      %v390 = vld [vmem:[%s1 + $0x120] sm:$0xff]
      %v391 = vld [vmem:[%s1 + $0x128] sm:$0xff]
      %v392 = vld [vmem:[%s1 + $0x130] sm:$0xff]
      %v393 = vld [vmem:[%s1 + $0x138] sm:$0xff]
      %v394 = vld [vmem:[%s1 + $0x140] sm:$0xf]
      %v395 = vld [vmem:[%s2] sm:$0x1]
      %v397 = vlaneseq
      %v398 = vshrl.u32 %v397, 7
      %v399 = vsub.s32 0, %v398
      %v400 = vrot.slane %v395, %v399
      %vm402 = vcmask 556032
      %v404 = vsel %vm402, %v260, 0
      %v407 = vsel %vm402, %v263, 0
      %v410 = vsel %vm402, %v266, 0
      %v413 = vsel %vm402, %v269, 0
      %v416 = vsel %vm402, %v272, 0
      %v419 = vsel %vm402, %v275, 0
      %v422 = vsel %vm402, %v278, 0
      %v425 = vsel %vm402, %v281, 0
      %v428 = vsel %vm402, %v284, 0
      %v431 = vsel %vm402, %v287, 0
      %v434 = vsel %vm402, %v290, 0
      %v437 = vsel %vm402, %v293, 0
      %v440 = vsel %vm402, %v296, 0
      %v443 = vsel %vm402, %v299, 0
      %v446 = vsel %vm402, %v302, 0
      %v449 = vsel %vm402, %v305, 0
      %v452 = vsel %vm402, %v308, 0
      %v455 = vsel %vm402, %v311, 0
      %v458 = vsel %vm402, %v314, 0
      %v461 = vsel %vm402, %v317, 0
      %v464 = vsel %vm402, %v320, 0
      %v467 = vsel %vm402, %v323, 0
      %v470 = vsel %vm402, %v326, 0
      %v473 = vsel %vm402, %v329, 0
      %v476 = vsel %vm402, %v332, 0
      %v479 = vsel %vm402, %v335, 0
      %v482 = vsel %vm402, %v338, 0
      %v485 = vsel %vm402, %v341, 0
      %v488 = vsel %vm402, %v344, 0
      %v491 = vsel %vm402, %v347, 0
      %v494 = vsel %vm402, %v350, 0
      %v497 = vsel %vm402, %v353, 0
      %vm499 = vcmask 1043456
      %v501 = vsel %vm499, %v394, 0
      %503 = vmatprep.subr.mxu0 0.0
      %504 = vmatpush1.msra.mxu0 %v369
      %505 = vmatprep.subr.mxu0 0.0
      %506 = vmatpush1.msra.mxu0 %v368
      %507 = vmatprep.subr.mxu0 0.0
      %508 = vmatpush1.msra.mxu0 %v367
      %509 = vmatprep.subr.mxu0 0.0
      %510 = vmatpush1.msra.mxu0 %v366
      %511 = vmatprep.subr.mxu0 0.0
      %512 = vmatpush1.msra.mxu0 %v365
      %513 = vmatprep.subr.mxu0 0.0
      %514 = vmatpush1.msra.mxu0 %v364
      %515 = vmatprep.subr.mxu0 0.0
      %516 = vmatpush1.msra.mxu0 %v363
      %517 = vmatprep.subr.mxu0 0.0
      %518 = vmatpush1.msra.mxu0 %v362
      %519 = vmatprep.subr.mxu0 0.0
      %520 = vmatpush1.msra.mxu0 %v361
      %521 = vmatprep.subr.mxu0 0.0
      %522 = vmatpush1.msra.mxu0 %v360
      %523 = vmatprep.subr.mxu0 0.0
      %524 = vmatpush1.msra.mxu0 %v359
      %525 = vmatprep.subr.mxu0 0.0
      %526 = vmatpush1.msra.mxu0 %v358
      %527 = vmatprep.subr.mxu0 0.0
      %528 = vmatpush1.msra.mxu0 %v357
      %529 = vmatprep.subr.mxu0 0.0
      %530 = vmatpush1.msra.mxu0 %v356
      %531 = vmatprep.subr.mxu0 0.0
      %532 = vmatpush1.msra.mxu0 %v355
      %533 = vmatprep.subr.mxu0 0.0
      %534 = vmatpush1.msra.mxu0 %v354
      %535 = vmatprep.subr.mxu0 0.0
      %536 = vmatpush2.msra.mxu0 %v385
      %537 = vmatprep.subr.mxu0 0.0
      %538 = vmatpush2.msra.mxu0 %v384
      %539 = vmatprep.subr.mxu0 0.0
      %540 = vmatpush2.msra.mxu0 %v383
      %541 = vmatprep.subr.mxu0 0.0
      %542 = vmatpush2.msra.mxu0 %v382
      %543 = vmatprep.subr.mxu0 0.0
      %544 = vmatpush2.msra.mxu0 %v381
      %545 = vmatprep.subr.mxu0 0.0
      %546 = vmatpush2.msra.mxu0 %v380
      %547 = vmatprep.subr.mxu0 0.0
      %548 = vmatpush2.msra.mxu0 %v379
      %549 = vmatprep.subr.mxu0 0.0
      %550 = vmatpush2.msra.mxu0 %v378
      %551 = vmatprep.subr.mxu0 0.0
      %552 = vmatpush2.msra.mxu0 %v377
      %553 = vmatprep.subr.mxu0 0.0
      %554 = vmatpush2.msra.mxu0 %v376
      %555 = vmatprep.subr.mxu0 0.0
      %556 = vmatpush2.msra.mxu0 %v375
      %557 = vmatprep.subr.mxu0 0.0
      %558 = vmatpush2.msra.mxu0 %v374
      %559 = vmatprep.subr.mxu0 0.0
      %560 = vmatpush2.msra.mxu0 %v373
      %561 = vmatprep.subr.mxu0 0.0
      %562 = vmatpush2.msra.mxu0 %v372
      %563 = vmatprep.subr.mxu0 0.0
      %564 = vmatpush2.msra.mxu0 %v371
      %565 = vmatprep.subr.mxu0 0.0
      %566 = vmatpush2.msra.mxu0 %v370
      %567 = vmatprep.mubr.f32.mxu0 %v259
      %568 = vmatmul.mubr.f32.gmra.mxu0 %v258
      %v569 = vpop.f32.mrf.mxu0
      %v570 = vadd.f32 %v400, %v569
      %v571 = vpop.f32.mrf.mxu0
      %572 = vmatprep.mubr.f32.mxu0 %v262
      %573 = vmatmul.mubr.f32.gmra.mxu0 %v261
      %v574 = vpop.f32.mrf.mxu0
      %v575 = vadd.f32 %v400, %v574
      %v576 = vpop.f32.mrf.mxu0
      %577 = vmatprep.mubr.f32.mxu0 %v265
      %578 = vmatmul.mubr.f32.gmra.mxu0 %v264
      %v579 = vpop.f32.mrf.mxu0
      %v580 = vadd.f32 %v400, %v579
      %v581 = vpop.f32.mrf.mxu0
      %582 = vmatprep.mubr.f32.mxu0 %v268
      %583 = vmatmul.mubr.f32.gmra.mxu0 %v267
      %v584 = vpop.f32.mrf.mxu0
      %v585 = vadd.f32 %v400, %v584
      %v586 = vpop.f32.mrf.mxu0
      %587 = vmatprep.mubr.f32.mxu0 %v271
      %588 = vmatmul.mubr.f32.gmra.mxu0 %v270
      %v589 = vpop.f32.mrf.mxu0
      %v590 = vadd.f32 %v400, %v589
      %v591 = vpop.f32.mrf.mxu0
      %592 = vmatprep.mubr.f32.mxu0 %v274
      %593 = vmatmul.mubr.f32.gmra.mxu0 %v273
      %v594 = vpop.f32.mrf.mxu0
      %v595 = vadd.f32 %v400, %v594
      %v596 = vpop.f32.mrf.mxu0
      %597 = vmatprep.mubr.f32.mxu0 %v277
      %598 = vmatmul.mubr.f32.gmra.mxu0 %v276
      %v599 = vpop.f32.mrf.mxu0
      %v600 = vadd.f32 %v400, %v599
      %v601 = vpop.f32.mrf.mxu0
      %602 = vmatprep.mubr.f32.mxu0 %v280
      %603 = vmatmul.mubr.f32.gmra.mxu0 %v279
      %v604 = vpop.f32.mrf.mxu0
      %v605 = vadd.f32 %v400, %v604
      %v606 = vpop.f32.mrf.mxu0
      %607 = vmatprep.mubr.f32.mxu0 %v283
      %608 = vmatmul.mubr.f32.gmra.mxu0 %v282
      %v609 = vpop.f32.mrf.mxu0
      %v610 = vadd.f32 %v400, %v609
      %v611 = vpop.f32.mrf.mxu0
      %612 = vmatprep.mubr.f32.mxu0 %v286
      %613 = vmatmul.mubr.f32.gmra.mxu0 %v285
      %v614 = vpop.f32.mrf.mxu0
      %v615 = vadd.f32 %v400, %v614
      %v616 = vpop.f32.mrf.mxu0
      %617 = vmatprep.mubr.f32.mxu0 %v289
      %618 = vmatmul.mubr.f32.gmra.mxu0 %v288
      %v619 = vpop.f32.mrf.mxu0
      %v620 = vadd.f32 %v400, %v619
      %v621 = vpop.f32.mrf.mxu0
      %622 = vmatprep.mubr.f32.mxu0 %v292
      %623 = vmatmul.mubr.f32.gmra.mxu0 %v291
      %v624 = vpop.f32.mrf.mxu0
      %v625 = vadd.f32 %v400, %v624
      %v626 = vpop.f32.mrf.mxu0
      %627 = vmatprep.mubr.f32.mxu0 %v295
      %628 = vmatmul.mubr.f32.gmra.mxu0 %v294
      %v629 = vpop.f32.mrf.mxu0
      %v630 = vadd.f32 %v400, %v629
      %v631 = vpop.f32.mrf.mxu0
      %632 = vmatprep.mubr.f32.mxu0 %v298
      %633 = vmatmul.mubr.f32.gmra.mxu0 %v297
      %v634 = vpop.f32.mrf.mxu0
      %v635 = vadd.f32 %v400, %v634
      %v636 = vpop.f32.mrf.mxu0
      %637 = vmatprep.mubr.f32.mxu0 %v301
      %638 = vmatmul.mubr.f32.gmra.mxu0 %v300
      %v639 = vpop.f32.mrf.mxu0
      %v640 = vadd.f32 %v400, %v639
      %v641 = vpop.f32.mrf.mxu0
      %642 = vmatprep.mubr.f32.mxu0 %v304
      %643 = vmatmul.mubr.f32.gmra.mxu0 %v303
      %v644 = vpop.f32.mrf.mxu0
      %v645 = vadd.f32 %v400, %v644
      %v646 = vpop.f32.mrf.mxu0
      %647 = vmatprep.mubr.f32.mxu0 %v307
      %648 = vmatmul.mubr.f32.gmra.mxu0 %v306
      %v649 = vpop.f32.mrf.mxu0
      %v650 = vadd.f32 %v400, %v649
      %v651 = vpop.f32.mrf.mxu0
      %652 = vmatprep.mubr.f32.mxu0 %v310
      %653 = vmatmul.mubr.f32.gmra.mxu0 %v309
      %v654 = vpop.f32.mrf.mxu0
      %v655 = vadd.f32 %v400, %v654
      %v656 = vpop.f32.mrf.mxu0
      %657 = vmatprep.mubr.f32.mxu0 %v313
      %658 = vmatmul.mubr.f32.gmra.mxu0 %v312
      %v659 = vpop.f32.mrf.mxu0
      %v660 = vadd.f32 %v400, %v659
      %v661 = vpop.f32.mrf.mxu0
      %662 = vmatprep.mubr.f32.mxu0 %v316
      %663 = vmatmul.mubr.f32.gmra.mxu0 %v315
      %v664 = vpop.f32.mrf.mxu0
      %v665 = vadd.f32 %v400, %v664
      %v666 = vpop.f32.mrf.mxu0
      %667 = vmatprep.mubr.f32.mxu0 %v319
      %668 = vmatmul.mubr.f32.gmra.mxu0 %v318
      %v669 = vpop.f32.mrf.mxu0
      %v670 = vadd.f32 %v400, %v669
      %v671 = vpop.f32.mrf.mxu0
      %672 = vmatprep.mubr.f32.mxu0 %v322
      %673 = vmatmul.mubr.f32.gmra.mxu0 %v321
      %v674 = vpop.f32.mrf.mxu0
      %v675 = vadd.f32 %v400, %v674
      %v676 = vpop.f32.mrf.mxu0
      %677 = vmatprep.mubr.f32.mxu0 %v325
      %678 = vmatmul.mubr.f32.gmra.mxu0 %v324
      %v679 = vpop.f32.mrf.mxu0
      %v680 = vadd.f32 %v400, %v679
      %v681 = vpop.f32.mrf.mxu0
      %682 = vmatprep.mubr.f32.mxu0 %v328
      %683 = vmatmul.mubr.f32.gmra.mxu0 %v327
      %v684 = vpop.f32.mrf.mxu0
      %v685 = vadd.f32 %v400, %v684
      %v686 = vpop.f32.mrf.mxu0
      %687 = vmatprep.mubr.f32.mxu0 %v331
      %688 = vmatmul.mubr.f32.gmra.mxu0 %v330
      %v689 = vpop.f32.mrf.mxu0
      %v690 = vadd.f32 %v400, %v689
      %v691 = vpop.f32.mrf.mxu0
      %692 = vmatprep.mubr.f32.mxu0 %v334
      %693 = vmatmul.mubr.f32.gmra.mxu0 %v333
      %v694 = vpop.f32.mrf.mxu0
      %v695 = vadd.f32 %v400, %v694
      %v696 = vpop.f32.mrf.mxu0
      %697 = vmatprep.mubr.f32.mxu0 %v337
      %698 = vmatmul.mubr.f32.gmra.mxu0 %v336
      %v699 = vpop.f32.mrf.mxu0
      %v700 = vadd.f32 %v400, %v699
      %v701 = vpop.f32.mrf.mxu0
      %702 = vmatprep.mubr.f32.mxu0 %v340
      %703 = vmatmul.mubr.f32.gmra.mxu0 %v339
      %v704 = vpop.f32.mrf.mxu0
      %v705 = vadd.f32 %v400, %v704
      %v706 = vpop.f32.mrf.mxu0
      %707 = vmatprep.mubr.f32.mxu0 %v343
      %708 = vmatmul.mubr.f32.gmra.mxu0 %v342
      %v709 = vpop.f32.mrf.mxu0
      %v710 = vadd.f32 %v400, %v709
      %v711 = vpop.f32.mrf.mxu0
      %712 = vmatprep.mubr.f32.mxu0 %v346
      %713 = vmatmul.mubr.f32.gmra.mxu0 %v345
      %v714 = vpop.f32.mrf.mxu0
      %v715 = vadd.f32 %v400, %v714
      %v716 = vpop.f32.mrf.mxu0
      %717 = vmatprep.mubr.f32.mxu0 %v349
      %718 = vmatmul.mubr.f32.gmra.mxu0 %v348
      %v719 = vpop.f32.mrf.mxu0
      %v720 = vadd.f32 %v400, %v719
      %v721 = vpop.f32.mrf.mxu0
      %722 = vmatprep.mubr.f32.mxu0 %v352
      %723 = vmatmul.mubr.f32.gmra.mxu0 %v351
      %v724 = vpop.f32.mrf.mxu0
      %v725 = vadd.f32 %v400, %v724
      %v726 = vpop.f32.mrf.mxu0
      %727 = vdwg.mxu0
      %728 = vmatprep.subr.mxu0 0.0
      %729 = vmatpush1.msra.mxu0 0.0
      %730 = vmatprep.subr.mxu0 0.0
      %731 = vmatpush1.msra.mxu0 0.0
      %732 = vmatprep.subr.mxu0 0.0
      %733 = vmatpush1.msra.mxu0 0.0
      %734 = vmatprep.subr.mxu0 0.0
      %735 = vmatpush1.msra.mxu0 0.0
      %736 = vmatprep.subr.mxu0 0.0
      %737 = vmatpush1.msra.mxu0 0.0
      %738 = vmatprep.subr.mxu0 0.0
      %739 = vmatpush1.msra.mxu0 0.0
      %740 = vmatprep.subr.mxu0 0.0
      %741 = vmatpush1.msra.mxu0 0.0
      %742 = vmatprep.subr.mxu0 0.0
      %743 = vmatpush1.msra.mxu0 %v501
      %744 = vmatprep.subr.mxu0 0.0
      %745 = vmatpush1.msra.mxu0 %v393
      %746 = vmatprep.subr.mxu0 0.0
      %747 = vmatpush1.msra.mxu0 %v392
      %748 = vmatprep.subr.mxu0 0.0
      %749 = vmatpush1.msra.mxu0 %v391
      %750 = vmatprep.subr.mxu0 0.0
      %751 = vmatpush1.msra.mxu0 %v390
      %752 = vmatprep.subr.mxu0 0.0
      %753 = vmatpush1.msra.mxu0 %v389
      %754 = vmatprep.subr.mxu0 0.0
      %755 = vmatpush1.msra.mxu0 %v388
      %756 = vmatprep.subr.mxu0 0.0
      %757 = vmatpush1.msra.mxu0 %v387
      %758 = vmatprep.subr.mxu0 0.0
      %759 = vmatpush1.msra.mxu0 %v386
      %760 = vmatprep.subr.mxu0 0.0
      %761 = vmatpush2.msra.mxu0 0.0
      %762 = vmatprep.subr.mxu0 0.0
      %763 = vmatpush2.msra.mxu0 0.0
      %764 = vmatprep.subr.mxu0 0.0
      %765 = vmatpush2.msra.mxu0 0.0
      %766 = vmatprep.subr.mxu0 0.0
      %767 = vmatpush2.msra.mxu0 0.0
      %768 = vmatprep.subr.mxu0 0.0
      %769 = vmatpush2.msra.mxu0 0.0
      %770 = vmatprep.subr.mxu0 0.0
      %771 = vmatpush2.msra.mxu0 0.0
      %772 = vmatprep.subr.mxu0 0.0
      %773 = vmatpush2.msra.mxu0 0.0
      %774 = vmatprep.subr.mxu0 0.0
      %775 = vmatpush2.msra.mxu0 0.0
      %776 = vmatprep.subr.mxu0 0.0
      %777 = vmatpush2.msra.mxu0 0.0
      %778 = vmatprep.subr.mxu0 0.0
      %779 = vmatpush2.msra.mxu0 0.0
      %780 = vmatprep.subr.mxu0 0.0
      %781 = vmatpush2.msra.mxu0 0.0
      %782 = vmatprep.subr.mxu0 0.0
      %783 = vmatpush2.msra.mxu0 0.0
      %784 = vmatprep.subr.mxu0 0.0
      %785 = vmatpush2.msra.mxu0 0.0
      %786 = vmatprep.subr.mxu0 0.0
      %787 = vmatpush2.msra.mxu0 0.0
      %788 = vmatprep.subr.mxu0 0.0
      %789 = vmatpush2.msra.mxu0 0.0
      %790 = vmatprep.subr.mxu0 0.0
      %791 = vmatpush2.msra.mxu0 0.0
      %792 = vmatprep.mubr.f32.mxu0 0.0
      %793 = vmatmul.mubr.f32.gmra.mxu0 %v404
      %v794 = vpop.f32.mrf.mxu0
      %v795 = vadd.f32 %v570, %v794
      %v796 = vpop.f32.mrf.mxu0
      %797 = vmatprep.mubr.f32.mxu0 0.0
      %798 = vmatmul.mubr.f32.gmra.mxu0 %v407
      %v799 = vpop.f32.mrf.mxu0
      %v800 = vadd.f32 %v575, %v799
      %v801 = vpop.f32.mrf.mxu0
      %802 = vmatprep.mubr.f32.mxu0 0.0
      %803 = vmatmul.mubr.f32.gmra.mxu0 %v410
      %v804 = vpop.f32.mrf.mxu0
      %v805 = vadd.f32 %v580, %v804
      %v806 = vpop.f32.mrf.mxu0
      %807 = vmatprep.mubr.f32.mxu0 0.0
      %808 = vmatmul.mubr.f32.gmra.mxu0 %v413
      %v809 = vpop.f32.mrf.mxu0
      %v810 = vadd.f32 %v585, %v809
      %v811 = vpop.f32.mrf.mxu0
      %812 = vmatprep.mubr.f32.mxu0 0.0
      %813 = vmatmul.mubr.f32.gmra.mxu0 %v416
      %v814 = vpop.f32.mrf.mxu0
      %v815 = vadd.f32 %v590, %v814
      %v816 = vpop.f32.mrf.mxu0
      %817 = vmatprep.mubr.f32.mxu0 0.0
      %818 = vmatmul.mubr.f32.gmra.mxu0 %v419
      %v819 = vpop.f32.mrf.mxu0
      %v820 = vadd.f32 %v595, %v819
      %v821 = vpop.f32.mrf.mxu0
      %822 = vmatprep.mubr.f32.mxu0 0.0
      %823 = vmatmul.mubr.f32.gmra.mxu0 %v422
      %v824 = vpop.f32.mrf.mxu0
      %v825 = vadd.f32 %v600, %v824
      %v826 = vpop.f32.mrf.mxu0
      %827 = vmatprep.mubr.f32.mxu0 0.0
      %828 = vmatmul.mubr.f32.gmra.mxu0 %v425
      %v829 = vpop.f32.mrf.mxu0
      %v830 = vadd.f32 %v605, %v829
      %v831 = vpop.f32.mrf.mxu0
      %832 = vmatprep.mubr.f32.mxu0 0.0
      %833 = vmatmul.mubr.f32.gmra.mxu0 %v428
      %v834 = vpop.f32.mrf.mxu0
      %v835 = vadd.f32 %v610, %v834
      %v836 = vpop.f32.mrf.mxu0
      %837 = vmatprep.mubr.f32.mxu0 0.0
      %838 = vmatmul.mubr.f32.gmra.mxu0 %v431
      %v839 = vpop.f32.mrf.mxu0
      %v840 = vadd.f32 %v615, %v839
      %v841 = vpop.f32.mrf.mxu0
      %842 = vmatprep.mubr.f32.mxu0 0.0
      %843 = vmatmul.mubr.f32.gmra.mxu0 %v434
      %v844 = vpop.f32.mrf.mxu0
      %v845 = vadd.f32 %v620, %v844
      %v846 = vpop.f32.mrf.mxu0
      %847 = vmatprep.mubr.f32.mxu0 0.0
      %848 = vmatmul.mubr.f32.gmra.mxu0 %v437
      %v849 = vpop.f32.mrf.mxu0
      %v850 = vadd.f32 %v625, %v849
      %v851 = vpop.f32.mrf.mxu0
      %852 = vmatprep.mubr.f32.mxu0 0.0
      %853 = vmatmul.mubr.f32.gmra.mxu0 %v440
      %v854 = vpop.f32.mrf.mxu0
      %v855 = vadd.f32 %v630, %v854
      %v856 = vpop.f32.mrf.mxu0
      %857 = vmatprep.mubr.f32.mxu0 0.0
      %858 = vmatmul.mubr.f32.gmra.mxu0 %v443
      %v859 = vpop.f32.mrf.mxu0
      %v860 = vadd.f32 %v635, %v859
      %v861 = vpop.f32.mrf.mxu0
      %862 = vmatprep.mubr.f32.mxu0 0.0
      %863 = vmatmul.mubr.f32.gmra.mxu0 %v446
      %v864 = vpop.f32.mrf.mxu0
      %v865 = vadd.f32 %v640, %v864
      %v866 = vpop.f32.mrf.mxu0
      %867 = vmatprep.mubr.f32.mxu0 0.0
      %868 = vmatmul.mubr.f32.gmra.mxu0 %v449
      %v869 = vpop.f32.mrf.mxu0
      %v870 = vadd.f32 %v645, %v869
      %v871 = vpop.f32.mrf.mxu0
      %872 = vmatprep.mubr.f32.mxu0 0.0
      %873 = vmatmul.mubr.f32.gmra.mxu0 %v452
      %v874 = vpop.f32.mrf.mxu0
      %v875 = vadd.f32 %v650, %v874
      %v876 = vpop.f32.mrf.mxu0
      %877 = vmatprep.mubr.f32.mxu0 0.0
      %878 = vmatmul.mubr.f32.gmra.mxu0 %v455
      %v879 = vpop.f32.mrf.mxu0
      %v880 = vadd.f32 %v655, %v879
      %v881 = vpop.f32.mrf.mxu0
      %882 = vmatprep.mubr.f32.mxu0 0.0
      %883 = vmatmul.mubr.f32.gmra.mxu0 %v458
      %v884 = vpop.f32.mrf.mxu0
      %v885 = vadd.f32 %v660, %v884
      %v886 = vpop.f32.mrf.mxu0
      %887 = vmatprep.mubr.f32.mxu0 0.0
      %888 = vmatmul.mubr.f32.gmra.mxu0 %v461
      %v889 = vpop.f32.mrf.mxu0
      %v890 = vadd.f32 %v665, %v889
      %v891 = vpop.f32.mrf.mxu0
      %892 = vmatprep.mubr.f32.mxu0 0.0
      %893 = vmatmul.mubr.f32.gmra.mxu0 %v464
      %v894 = vpop.f32.mrf.mxu0
      %v895 = vadd.f32 %v670, %v894
      %v896 = vpop.f32.mrf.mxu0
      %897 = vmatprep.mubr.f32.mxu0 0.0
      %898 = vmatmul.mubr.f32.gmra.mxu0 %v467
      %v899 = vpop.f32.mrf.mxu0
      %v900 = vadd.f32 %v675, %v899
      %v901 = vpop.f32.mrf.mxu0
      %902 = vmatprep.mubr.f32.mxu0 0.0
      %903 = vmatmul.mubr.f32.gmra.mxu0 %v470
      %v904 = vpop.f32.mrf.mxu0
      %v905 = vadd.f32 %v680, %v904
      %v906 = vpop.f32.mrf.mxu0
      %907 = vmatprep.mubr.f32.mxu0 0.0
      %908 = vmatmul.mubr.f32.gmra.mxu0 %v473
      %v909 = vpop.f32.mrf.mxu0
      %v910 = vadd.f32 %v685, %v909
      %v911 = vpop.f32.mrf.mxu0
      %912 = vmatprep.mubr.f32.mxu0 0.0
      %913 = vmatmul.mubr.f32.gmra.mxu0 %v476
      %v914 = vpop.f32.mrf.mxu0
      %v915 = vadd.f32 %v690, %v914
      %v916 = vpop.f32.mrf.mxu0
      %917 = vmatprep.mubr.f32.mxu0 0.0
      %918 = vmatmul.mubr.f32.gmra.mxu0 %v479
      %v919 = vpop.f32.mrf.mxu0
      %v920 = vadd.f32 %v695, %v919
      %v921 = vpop.f32.mrf.mxu0
      %922 = vmatprep.mubr.f32.mxu0 0.0
      %923 = vmatmul.mubr.f32.gmra.mxu0 %v482
      %v924 = vpop.f32.mrf.mxu0
      %v925 = vadd.f32 %v700, %v924
      %v926 = vpop.f32.mrf.mxu0
      %927 = vmatprep.mubr.f32.mxu0 0.0
      %928 = vmatmul.mubr.f32.gmra.mxu0 %v485
      %v929 = vpop.f32.mrf.mxu0
      %v930 = vadd.f32 %v705, %v929
      %v931 = vpop.f32.mrf.mxu0
      %932 = vmatprep.mubr.f32.mxu0 0.0
      %933 = vmatmul.mubr.f32.gmra.mxu0 %v488
      %v934 = vpop.f32.mrf.mxu0
      %v935 = vadd.f32 %v710, %v934
      %v936 = vpop.f32.mrf.mxu0
      %937 = vmatprep.mubr.f32.mxu0 0.0
      %938 = vmatmul.mubr.f32.gmra.mxu0 %v491
      %v939 = vpop.f32.mrf.mxu0
      %v940 = vadd.f32 %v715, %v939
      %v941 = vpop.f32.mrf.mxu0
      %942 = vmatprep.mubr.f32.mxu0 0.0
      %943 = vmatmul.mubr.f32.gmra.mxu0 %v494
      %v944 = vpop.f32.mrf.mxu0
      %v945 = vadd.f32 %v720, %v944
      %v946 = vpop.f32.mrf.mxu0
      %947 = vmatprep.mubr.f32.mxu0 0.0
      %948 = vmatmul.mubr.f32.gmra.mxu0 %v497
      %v949 = vpop.f32.mrf.mxu0
      %v950 = vadd.f32 %v725, %v949
      %v951 = vpop.f32.mrf.mxu0
      %952 = vdwg.mxu0
      %v953 = vsub.f32 0.0, %v795
      %v954 = vsub.f32 0.0, %v800
      %v955 = vsub.f32 0.0, %v805
      %v956 = vsub.f32 0.0, %v810
      %v957 = vsub.f32 0.0, %v815
      %v958 = vsub.f32 0.0, %v820
      %v959 = vsub.f32 0.0, %v825
      %v960 = vsub.f32 0.0, %v830
      %v961 = vsub.f32 0.0, %v835
      %v962 = vsub.f32 0.0, %v840
      %v963 = vsub.f32 0.0, %v845
      %v964 = vsub.f32 0.0, %v850
      %v965 = vsub.f32 0.0, %v855
      %v966 = vsub.f32 0.0, %v860
      %v967 = vsub.f32 0.0, %v865
      %v968 = vsub.f32 0.0, %v870
      %v969 = vsub.f32 0.0, %v875
      %v970 = vsub.f32 0.0, %v880
      %v971 = vsub.f32 0.0, %v885
      %v972 = vsub.f32 0.0, %v890
      %v973 = vsub.f32 0.0, %v895
      %v974 = vsub.f32 0.0, %v900
      %v975 = vsub.f32 0.0, %v905
      %v976 = vsub.f32 0.0, %v910
      %v977 = vsub.f32 0.0, %v915
      %v978 = vsub.f32 0.0, %v920
      %v979 = vsub.f32 0.0, %v925
      %v980 = vsub.f32 0.0, %v930
      %v981 = vsub.f32 0.0, %v935
      %v982 = vsub.f32 0.0, %v940
      %v983 = vsub.f32 0.0, %v945
      %v984 = vsub.f32 0.0, %v950
      %v985 = vmul.f32 %v953, 1.442695
      %v986 = vpow.pop %v985
      %v987 = vmul.f32 %v954, 1.442695
      %v988 = vpow.pop %v987
      %v989 = vmul.f32 %v955, 1.442695
      %v990 = vpow.pop %v989
      %v991 = vmul.f32 %v956, 1.442695
      %v992 = vpow.pop %v991
      %v993 = vmul.f32 %v957, 1.442695
      %v994 = vpow.pop %v993
      %v995 = vmul.f32 %v958, 1.442695
      %v996 = vpow.pop %v995
      %v997 = vmul.f32 %v959, 1.442695
      %v998 = vpow.pop %v997
      %v999 = vmul.f32 %v960, 1.442695
      %v1000 = vpow.pop %v999
      %v1001 = vmul.f32 %v961, 1.442695
      %v1002 = vpow.pop %v1001
      %v1003 = vmul.f32 %v962, 1.442695
      %v1004 = vpow.pop %v1003
      %v1005 = vmul.f32 %v963, 1.442695
      %v1006 = vpow.pop %v1005
      %v1007 = vmul.f32 %v964, 1.442695
      %v1008 = vpow.pop %v1007
      %v1009 = vmul.f32 %v965, 1.442695
      %v1010 = vpow.pop %v1009
      %v1011 = vmul.f32 %v966, 1.442695
      %v1012 = vpow.pop %v1011
      %v1013 = vmul.f32 %v967, 1.442695
      %v1014 = vpow.pop %v1013
      %v1015 = vmul.f32 %v968, 1.442695
      %v1016 = vpow.pop %v1015
      %v1017 = vmul.f32 %v969, 1.442695
      %v1018 = vpow.pop %v1017
      %v1019 = vmul.f32 %v970, 1.442695
      %v1020 = vpow.pop %v1019
      %v1021 = vmul.f32 %v971, 1.442695
      %v1022 = vpow.pop %v1021
      %v1023 = vmul.f32 %v972, 1.442695
      %v1024 = vpow.pop %v1023
      %v1025 = vmul.f32 %v973, 1.442695
      %v1026 = vpow.pop %v1025
      %v1027 = vmul.f32 %v974, 1.442695
      %v1028 = vpow.pop %v1027
      %v1029 = vmul.f32 %v975, 1.442695
      %v1030 = vpow.pop %v1029
      %v1031 = vmul.f32 %v976, 1.442695
      %v1032 = vpow.pop %v1031
      %v1033 = vmul.f32 %v977, 1.442695
      %v1034 = vpow.pop %v1033
      %v1035 = vmul.f32 %v978, 1.442695
      %v1036 = vpow.pop %v1035
      %v1037 = vmul.f32 %v979, 1.442695
      %v1038 = vpow.pop %v1037
      %v1039 = vmul.f32 %v980, 1.442695
      %v1040 = vpow.pop %v1039
      %v1041 = vmul.f32 %v981, 1.442695
      %v1042 = vpow.pop %v1041
      %v1043 = vmul.f32 %v982, 1.442695
      %v1044 = vpow.pop %v1043
      %v1045 = vmul.f32 %v983, 1.442695
      %v1046 = vpow.pop %v1045
      %v1047 = vmul.f32 %v984, 1.442695
      %v1048 = vpow.pop %v1047
      %v1049 = vadd.f32 %v986, 1.0
      %v1050 = vadd.f32 %v988, 1.0
      %v1051 = vadd.f32 %v990, 1.0
      %v1052 = vadd.f32 %v992, 1.0
      %v1053 = vadd.f32 %v994, 1.0
      %v1054 = vadd.f32 %v996, 1.0
      %v1055 = vadd.f32 %v998, 1.0
      %v1056 = vadd.f32 %v1000, 1.0
      %v1057 = vadd.f32 %v1002, 1.0
      %v1058 = vadd.f32 %v1004, 1.0
      %v1059 = vadd.f32 %v1006, 1.0
      %v1060 = vadd.f32 %v1008, 1.0
      %v1061 = vadd.f32 %v1010, 1.0
      %v1062 = vadd.f32 %v1012, 1.0
      %v1063 = vadd.f32 %v1014, 1.0
      %v1064 = vadd.f32 %v1016, 1.0
      %v1065 = vadd.f32 %v1018, 1.0
      %v1066 = vadd.f32 %v1020, 1.0
      %v1067 = vadd.f32 %v1022, 1.0
      %v1068 = vadd.f32 %v1024, 1.0
      %v1069 = vadd.f32 %v1026, 1.0
      %v1070 = vadd.f32 %v1028, 1.0
      %v1071 = vadd.f32 %v1030, 1.0
      %v1072 = vadd.f32 %v1032, 1.0
      %v1073 = vadd.f32 %v1034, 1.0
      %v1074 = vadd.f32 %v1036, 1.0
      %v1075 = vadd.f32 %v1038, 1.0
      %v1076 = vadd.f32 %v1040, 1.0
      %v1077 = vadd.f32 %v1042, 1.0
      %v1078 = vadd.f32 %v1044, 1.0
      %v1079 = vadd.f32 %v1046, 1.0
      %v1080 = vadd.f32 %v1048, 1.0
      %v1081 = vrcp.pop %v1049
      %v1082 = vmul.f32 1.0, %v1081
      %v1083 = vrcp.pop %v1050
      %v1084 = vmul.f32 1.0, %v1083
      %v1085 = vrcp.pop %v1051
      %v1086 = vmul.f32 1.0, %v1085
      %v1087 = vrcp.pop %v1052
      %v1088 = vmul.f32 1.0, %v1087
      %v1089 = vrcp.pop %v1053
      %v1090 = vmul.f32 1.0, %v1089
      %v1091 = vrcp.pop %v1054
      %v1092 = vmul.f32 1.0, %v1091
      %v1093 = vrcp.pop %v1055
      %v1094 = vmul.f32 1.0, %v1093
      %v1095 = vrcp.pop %v1056
      %v1096 = vmul.f32 1.0, %v1095
      %v1097 = vrcp.pop %v1057
      %v1098 = vmul.f32 1.0, %v1097
      %v1099 = vrcp.pop %v1058
      %v1100 = vmul.f32 1.0, %v1099
      %v1101 = vrcp.pop %v1059
      %v1102 = vmul.f32 1.0, %v1101
      %v1103 = vrcp.pop %v1060
      %v1104 = vmul.f32 1.0, %v1103
      %v1105 = vrcp.pop %v1061
      %v1106 = vmul.f32 1.0, %v1105
      %v1107 = vrcp.pop %v1062
      %v1108 = vmul.f32 1.0, %v1107
      %v1109 = vrcp.pop %v1063
      %v1110 = vmul.f32 1.0, %v1109
      %v1111 = vrcp.pop %v1064
      %v1112 = vmul.f32 1.0, %v1111
      %v1113 = vrcp.pop %v1065
      %v1114 = vmul.f32 1.0, %v1113
      %v1115 = vrcp.pop %v1066
      %v1116 = vmul.f32 1.0, %v1115
      %v1117 = vrcp.pop %v1067
      %v1118 = vmul.f32 1.0, %v1117
      %v1119 = vrcp.pop %v1068
      %v1120 = vmul.f32 1.0, %v1119
      %v1121 = vrcp.pop %v1069
      %v1122 = vmul.f32 1.0, %v1121
      %v1123 = vrcp.pop %v1070
      %v1124 = vmul.f32 1.0, %v1123
      %v1125 = vrcp.pop %v1071
      %v1126 = vmul.f32 1.0, %v1125
      %v1127 = vrcp.pop %v1072
      %v1128 = vmul.f32 1.0, %v1127
      %v1129 = vrcp.pop %v1073
      %v1130 = vmul.f32 1.0, %v1129
      %v1131 = vrcp.pop %v1074
      %v1132 = vmul.f32 1.0, %v1131
      %v1133 = vrcp.pop %v1075
      %v1134 = vmul.f32 1.0, %v1133
      %v1135 = vrcp.pop %v1076
      %v1136 = vmul.f32 1.0, %v1135
      %v1137 = vrcp.pop %v1077
      %v1138 = vmul.f32 1.0, %v1137
      %v1139 = vrcp.pop %v1078
      %v1140 = vmul.f32 1.0, %v1139
      %v1141 = vrcp.pop %v1079
      %v1142 = vmul.f32 1.0, %v1141
      %v1143 = vrcp.pop %v1080
      %v1144 = vmul.f32 1.0, %v1143
      %v1145 = vtanh.pop %v795
      %v1146 = vtanh.pop %v800
      %v1147 = vtanh.pop %v805
      %v1148 = vtanh.pop %v810
      %v1149 = vtanh.pop %v815
      %v1150 = vtanh.pop %v820
      %v1151 = vtanh.pop %v825
      %v1152 = vtanh.pop %v830
      %v1153 = vtanh.pop %v835
      %v1154 = vtanh.pop %v840
      %v1155 = vtanh.pop %v845
      %v1156 = vtanh.pop %v850
      %v1157 = vtanh.pop %v855
      %v1158 = vtanh.pop %v860
      %v1159 = vtanh.pop %v865
      %v1160 = vtanh.pop %v870
      %v1161 = vtanh.pop %v875
      %v1162 = vtanh.pop %v880
      %v1163 = vtanh.pop %v885
      %v1164 = vtanh.pop %v890
      %v1165 = vtanh.pop %v895
      %v1166 = vtanh.pop %v900
      %v1167 = vtanh.pop %v905
      %v1168 = vtanh.pop %v910
      %v1169 = vtanh.pop %v915
      %v1170 = vtanh.pop %v920
      %v1171 = vtanh.pop %v925
      %v1172 = vtanh.pop %v930
      %v1173 = vtanh.pop %v935
      %v1174 = vtanh.pop %v940
      %v1175 = vtanh.pop %v945
      %v1176 = vtanh.pop %v950
      %v1177 = vld [vmem:[%s247] sm:$0xff]
      %v1178 = vld [vmem:[%s247 + $0x8] sm:$0xff]
      %v1179 = vld [vmem:[%s247 + $0x10] sm:$0xff]
      %v1180 = vld [vmem:[%s247 + $0x18] sm:$0xff]
      %v1181 = vld [vmem:[%s247 + $0x20] sm:$0xff]
      %v1182 = vld [vmem:[%s247 + $0x28] sm:$0xff]
      %v1183 = vld [vmem:[%s247 + $0x30] sm:$0xff]
      %v1184 = vld [vmem:[%s247 + $0x38] sm:$0xff]
      %v1185 = vld [vmem:[%s247 + $0x40] sm:$0xff]
      %v1186 = vld [vmem:[%s247 + $0x48] sm:$0xff]
      %v1187 = vld [vmem:[%s247 + $0x50] sm:$0xff]
      %v1188 = vld [vmem:[%s247 + $0x58] sm:$0xff]
      %v1189 = vld [vmem:[%s247 + $0x60] sm:$0xff]
      %v1190 = vld [vmem:[%s247 + $0x68] sm:$0xff]
      %v1191 = vld [vmem:[%s247 + $0x70] sm:$0xff]
      %v1192 = vld [vmem:[%s247 + $0x78] sm:$0xff]
      %v1193 = vld [vmem:[%s247 + $0x80] sm:$0xff]
      %v1194 = vld [vmem:[%s247 + $0x88] sm:$0xff]
      %v1195 = vld [vmem:[%s247 + $0x90] sm:$0xff]
      %v1196 = vld [vmem:[%s247 + $0x98] sm:$0xff]
      %v1197 = vld [vmem:[%s247 + $0xa0] sm:$0xff]
      %v1198 = vld [vmem:[%s247 + $0xa8] sm:$0xff]
      %v1199 = vld [vmem:[%s247 + $0xb0] sm:$0xff]
      %v1200 = vld [vmem:[%s247 + $0xb8] sm:$0xff]
      %v1201 = vld [vmem:[%s247 + $0xc0] sm:$0xff]
      %v1202 = vld [vmem:[%s247 + $0xc8] sm:$0xff]
      %v1203 = vld [vmem:[%s247 + $0xd0] sm:$0xff]
      %v1204 = vld [vmem:[%s247 + $0xd8] sm:$0xff]
      %v1205 = vld [vmem:[%s247 + $0xe0] sm:$0xff]
      %v1206 = vld [vmem:[%s247 + $0xe8] sm:$0xff]
      %v1207 = vld [vmem:[%s247 + $0xf0] sm:$0xff]
      %v1208 = vld [vmem:[%s247 + $0xf8] sm:$0xff]
      %1241 = vrot.lane.b32.xlu0 %v1177, 32
      %v1242 = vpop.permute.xlu0 %1241
      %1243 = vrot.lane.b32.xlu0 %v1178, 32
      %v1244 = vpop.permute.xlu0 %1243
      %1245 = vrot.lane.b32.xlu0 %v1179, 32
      %v1246 = vpop.permute.xlu0 %1245
      %1247 = vrot.lane.b32.xlu0 %v1180, 32
      %v1248 = vpop.permute.xlu0 %1247
      %1249 = vrot.lane.b32.xlu0 %v1181, 32
      %v1250 = vpop.permute.xlu0 %1249
      %1251 = vrot.lane.b32.xlu0 %v1182, 32
      %v1252 = vpop.permute.xlu0 %1251
      %1253 = vrot.lane.b32.xlu0 %v1183, 32
      %v1254 = vpop.permute.xlu0 %1253
      %1255 = vrot.lane.b32.xlu0 %v1184, 32
      %v1256 = vpop.permute.xlu0 %1255
      %1257 = vrot.lane.b32.xlu0 %v1185, 32
      %v1258 = vpop.permute.xlu0 %1257
      %1259 = vrot.lane.b32.xlu0 %v1186, 32
      %v1260 = vpop.permute.xlu0 %1259
      %1261 = vrot.lane.b32.xlu0 %v1187, 32
      %v1262 = vpop.permute.xlu0 %1261
      %1263 = vrot.lane.b32.xlu0 %v1188, 32
      %v1264 = vpop.permute.xlu0 %1263
      %1265 = vrot.lane.b32.xlu0 %v1189, 32
      %v1266 = vpop.permute.xlu0 %1265
      %1267 = vrot.lane.b32.xlu0 %v1190, 32
      %v1268 = vpop.permute.xlu0 %1267
      %1269 = vrot.lane.b32.xlu0 %v1191, 32
      %v1270 = vpop.permute.xlu0 %1269
      %1271 = vrot.lane.b32.xlu0 %v1192, 32
      %v1272 = vpop.permute.xlu0 %1271
      %1273 = vrot.lane.b32.xlu0 %v1193, 32
      %v1274 = vpop.permute.xlu0 %1273
      %1275 = vrot.lane.b32.xlu0 %v1194, 32
      %v1276 = vpop.permute.xlu0 %1275
      %1277 = vrot.lane.b32.xlu0 %v1195, 32
      %v1278 = vpop.permute.xlu0 %1277
      %1279 = vrot.lane.b32.xlu0 %v1196, 32
      %v1280 = vpop.permute.xlu0 %1279
      %1281 = vrot.lane.b32.xlu0 %v1197, 32
      %v1282 = vpop.permute.xlu0 %1281
      %1283 = vrot.lane.b32.xlu0 %v1198, 32
      %v1284 = vpop.permute.xlu0 %1283
      %1285 = vrot.lane.b32.xlu0 %v1199, 32
      %v1286 = vpop.permute.xlu0 %1285
      %1287 = vrot.lane.b32.xlu0 %v1200, 32
      %v1288 = vpop.permute.xlu0 %1287
      %1289 = vrot.lane.b32.xlu0 %v1201, 32
      %v1290 = vpop.permute.xlu0 %1289
      %1291 = vrot.lane.b32.xlu0 %v1202, 32
      %v1292 = vpop.permute.xlu0 %1291
      %1293 = vrot.lane.b32.xlu0 %v1203, 32
      %v1294 = vpop.permute.xlu0 %1293
      %1295 = vrot.lane.b32.xlu0 %v1204, 32
      %v1296 = vpop.permute.xlu0 %1295
      %1297 = vrot.lane.b32.xlu0 %v1205, 32
      %v1298 = vpop.permute.xlu0 %1297
      %1299 = vrot.lane.b32.xlu0 %v1206, 32
      %v1300 = vpop.permute.xlu0 %1299
      %1301 = vrot.lane.b32.xlu0 %v1207, 32
      %v1302 = vpop.permute.xlu0 %1301
      %1303 = vrot.lane.b32.xlu0 %v1208, 32
      %v1304 = vpop.permute.xlu0 %1303
      %v1337 = vmul.f32 %v1082, %v1242
      %v1338 = vmul.f32 %v1084, %v1244
      %v1339 = vmul.f32 %v1086, %v1246
      %v1340 = vmul.f32 %v1088, %v1248
      %v1341 = vmul.f32 %v1090, %v1250
      %v1342 = vmul.f32 %v1092, %v1252
      %v1343 = vmul.f32 %v1094, %v1254
      %v1344 = vmul.f32 %v1096, %v1256
      %v1345 = vmul.f32 %v1098, %v1258
      %v1346 = vmul.f32 %v1100, %v1260
      %v1347 = vmul.f32 %v1102, %v1262
      %v1348 = vmul.f32 %v1104, %v1264
      %v1349 = vmul.f32 %v1106, %v1266
      %v1350 = vmul.f32 %v1108, %v1268
      %v1351 = vmul.f32 %v1110, %v1270
      %v1352 = vmul.f32 %v1112, %v1272
      %v1353 = vmul.f32 %v1114, %v1274
      %v1354 = vmul.f32 %v1116, %v1276
      %v1355 = vmul.f32 %v1118, %v1278
      %v1356 = vmul.f32 %v1120, %v1280
      %v1357 = vmul.f32 %v1122, %v1282
      %v1358 = vmul.f32 %v1124, %v1284
      %v1359 = vmul.f32 %v1126, %v1286
      %v1360 = vmul.f32 %v1128, %v1288
      %v1361 = vmul.f32 %v1130, %v1290
      %v1362 = vmul.f32 %v1132, %v1292
      %v1363 = vmul.f32 %v1134, %v1294
      %v1364 = vmul.f32 %v1136, %v1296
      %v1365 = vmul.f32 %v1138, %v1298
      %v1366 = vmul.f32 %v1140, %v1300
      %v1367 = vmul.f32 %v1142, %v1302
      %v1368 = vmul.f32 %v1144, %v1304
      %1401 = vrot.lane.b32.xlu0 %v1145, 32
      %v1402 = vpop.permute.xlu0 %1401
      %1403 = vrot.lane.b32.xlu0 %v1146, 32
      %v1404 = vpop.permute.xlu0 %1403
      %1405 = vrot.lane.b32.xlu0 %v1147, 32
      %v1406 = vpop.permute.xlu0 %1405
      %1407 = vrot.lane.b32.xlu0 %v1148, 32
      %v1408 = vpop.permute.xlu0 %1407
      %1409 = vrot.lane.b32.xlu0 %v1149, 32
      %v1410 = vpop.permute.xlu0 %1409
      %1411 = vrot.lane.b32.xlu0 %v1150, 32
      %v1412 = vpop.permute.xlu0 %1411
      %1413 = vrot.lane.b32.xlu0 %v1151, 32
      %v1414 = vpop.permute.xlu0 %1413
      %1415 = vrot.lane.b32.xlu0 %v1152, 32
      %v1416 = vpop.permute.xlu0 %1415
      %1417 = vrot.lane.b32.xlu0 %v1153, 32
      %v1418 = vpop.permute.xlu0 %1417
      %1419 = vrot.lane.b32.xlu0 %v1154, 32
      %v1420 = vpop.permute.xlu0 %1419
      %1421 = vrot.lane.b32.xlu0 %v1155, 32
      %v1422 = vpop.permute.xlu0 %1421
      %1423 = vrot.lane.b32.xlu0 %v1156, 32
      %v1424 = vpop.permute.xlu0 %1423
      %1425 = vrot.lane.b32.xlu0 %v1157, 32
      %v1426 = vpop.permute.xlu0 %1425
      %1427 = vrot.lane.b32.xlu0 %v1158, 32
      %v1428 = vpop.permute.xlu0 %1427
      %1429 = vrot.lane.b32.xlu0 %v1159, 32
      %v1430 = vpop.permute.xlu0 %1429
      %1431 = vrot.lane.b32.xlu0 %v1160, 32
      %v1432 = vpop.permute.xlu0 %1431
      %1433 = vrot.lane.b32.xlu0 %v1161, 32
      %v1434 = vpop.permute.xlu0 %1433
      %1435 = vrot.lane.b32.xlu0 %v1162, 32
      %v1436 = vpop.permute.xlu0 %1435
      %1437 = vrot.lane.b32.xlu0 %v1163, 32
      %v1438 = vpop.permute.xlu0 %1437
      %1439 = vrot.lane.b32.xlu0 %v1164, 32
      %v1440 = vpop.permute.xlu0 %1439
      %1441 = vrot.lane.b32.xlu0 %v1165, 32
      %v1442 = vpop.permute.xlu0 %1441
      %1443 = vrot.lane.b32.xlu0 %v1166, 32
      %v1444 = vpop.permute.xlu0 %1443
      %1445 = vrot.lane.b32.xlu0 %v1167, 32
      %v1446 = vpop.permute.xlu0 %1445
      %1447 = vrot.lane.b32.xlu0 %v1168, 32
      %v1448 = vpop.permute.xlu0 %1447
      %1449 = vrot.lane.b32.xlu0 %v1169, 32
      %v1450 = vpop.permute.xlu0 %1449
      %1451 = vrot.lane.b32.xlu0 %v1170, 32
      %v1452 = vpop.permute.xlu0 %1451
      %1453 = vrot.lane.b32.xlu0 %v1171, 32
      %v1454 = vpop.permute.xlu0 %1453
      %1455 = vrot.lane.b32.xlu0 %v1172, 32
      %v1456 = vpop.permute.xlu0 %1455
      %1457 = vrot.lane.b32.xlu0 %v1173, 32
      %v1458 = vpop.permute.xlu0 %1457
      %1459 = vrot.lane.b32.xlu0 %v1174, 32
      %v1460 = vpop.permute.xlu0 %1459
      %1461 = vrot.lane.b32.xlu0 %v1175, 32
      %v1462 = vpop.permute.xlu0 %1461
      %1463 = vrot.lane.b32.xlu0 %v1176, 32
      %v1464 = vpop.permute.xlu0 %1463
      %v1497 = vmul.f32 %v1082, %v1402
      %v1498 = vmul.f32 %v1084, %v1404
      %v1499 = vmul.f32 %v1086, %v1406
      %v1500 = vmul.f32 %v1088, %v1408
      %v1501 = vmul.f32 %v1090, %v1410
      %v1502 = vmul.f32 %v1092, %v1412
      %v1503 = vmul.f32 %v1094, %v1414
      %v1504 = vmul.f32 %v1096, %v1416
      %v1505 = vmul.f32 %v1098, %v1418
      %v1506 = vmul.f32 %v1100, %v1420
      %v1507 = vmul.f32 %v1102, %v1422
      %v1508 = vmul.f32 %v1104, %v1424
      %v1509 = vmul.f32 %v1106, %v1426
      %v1510 = vmul.f32 %v1108, %v1428
      %v1511 = vmul.f32 %v1110, %v1430
      %v1512 = vmul.f32 %v1112, %v1432
      %v1513 = vmul.f32 %v1114, %v1434
      %v1514 = vmul.f32 %v1116, %v1436
      %v1515 = vmul.f32 %v1118, %v1438
      %v1516 = vmul.f32 %v1120, %v1440
      %v1517 = vmul.f32 %v1122, %v1442
      %v1518 = vmul.f32 %v1124, %v1444
      %v1519 = vmul.f32 %v1126, %v1446
      %v1520 = vmul.f32 %v1128, %v1448
      %v1521 = vmul.f32 %v1130, %v1450
      %v1522 = vmul.f32 %v1132, %v1452
      %v1523 = vmul.f32 %v1134, %v1454
      %v1524 = vmul.f32 %v1136, %v1456
      %v1525 = vmul.f32 %v1138, %v1458
      %v1526 = vmul.f32 %v1140, %v1460
      %v1527 = vmul.f32 %v1142, %v1462
      %v1528 = vmul.f32 %v1144, %v1464
      %1561 = vrot.lane.b32.xlu0 %v1497, 32
      %v1562 = vpop.permute.xlu0 %1561
      %1563 = vrot.lane.b32.xlu0 %v1498, 32
      %v1564 = vpop.permute.xlu0 %1563
      %1565 = vrot.lane.b32.xlu0 %v1499, 32
      %v1566 = vpop.permute.xlu0 %1565
      %1567 = vrot.lane.b32.xlu0 %v1500, 32
      %v1568 = vpop.permute.xlu0 %1567
      %1569 = vrot.lane.b32.xlu0 %v1501, 32
      %v1570 = vpop.permute.xlu0 %1569
      %1571 = vrot.lane.b32.xlu0 %v1502, 32
      %v1572 = vpop.permute.xlu0 %1571
      %1573 = vrot.lane.b32.xlu0 %v1503, 32
      %v1574 = vpop.permute.xlu0 %1573
      %1575 = vrot.lane.b32.xlu0 %v1504, 32
      %v1576 = vpop.permute.xlu0 %1575
      %1577 = vrot.lane.b32.xlu0 %v1505, 32
      %v1578 = vpop.permute.xlu0 %1577
      %1579 = vrot.lane.b32.xlu0 %v1506, 32
      %v1580 = vpop.permute.xlu0 %1579
      %1581 = vrot.lane.b32.xlu0 %v1507, 32
      %v1582 = vpop.permute.xlu0 %1581
      %1583 = vrot.lane.b32.xlu0 %v1508, 32
      %v1584 = vpop.permute.xlu0 %1583
      %1585 = vrot.lane.b32.xlu0 %v1509, 32
      %v1586 = vpop.permute.xlu0 %1585
      %1587 = vrot.lane.b32.xlu0 %v1510, 32
      %v1588 = vpop.permute.xlu0 %1587
      %1589 = vrot.lane.b32.xlu0 %v1511, 32
      %v1590 = vpop.permute.xlu0 %1589
      %1591 = vrot.lane.b32.xlu0 %v1512, 32
      %v1592 = vpop.permute.xlu0 %1591
      %1593 = vrot.lane.b32.xlu0 %v1513, 32
      %v1594 = vpop.permute.xlu0 %1593
      %1595 = vrot.lane.b32.xlu0 %v1514, 32
      %v1596 = vpop.permute.xlu0 %1595
      %1597 = vrot.lane.b32.xlu0 %v1515, 32
      %v1598 = vpop.permute.xlu0 %1597
      %1599 = vrot.lane.b32.xlu0 %v1516, 32
      %v1600 = vpop.permute.xlu0 %1599
      %1601 = vrot.lane.b32.xlu0 %v1517, 32
      %v1602 = vpop.permute.xlu0 %1601
      %1603 = vrot.lane.b32.xlu0 %v1518, 32
      %v1604 = vpop.permute.xlu0 %1603
      %1605 = vrot.lane.b32.xlu0 %v1519, 32
      %v1606 = vpop.permute.xlu0 %1605
      %1607 = vrot.lane.b32.xlu0 %v1520, 32
      %v1608 = vpop.permute.xlu0 %1607
      %1609 = vrot.lane.b32.xlu0 %v1521, 32
      %v1610 = vpop.permute.xlu0 %1609
      %1611 = vrot.lane.b32.xlu0 %v1522, 32
      %v1612 = vpop.permute.xlu0 %1611
      %1613 = vrot.lane.b32.xlu0 %v1523, 32
      %v1614 = vpop.permute.xlu0 %1613
      %1615 = vrot.lane.b32.xlu0 %v1524, 32
      %v1616 = vpop.permute.xlu0 %1615
      %1617 = vrot.lane.b32.xlu0 %v1525, 32
      %v1618 = vpop.permute.xlu0 %1617
      %1619 = vrot.lane.b32.xlu0 %v1526, 32
      %v1620 = vpop.permute.xlu0 %1619
      %1621 = vrot.lane.b32.xlu0 %v1527, 32
      %v1622 = vpop.permute.xlu0 %1621
      %1623 = vrot.lane.b32.xlu0 %v1528, 32
      %v1624 = vpop.permute.xlu0 %1623
      %v1657 = vadd.f32 %v1337, %v1562
      %v1658 = vadd.f32 %v1338, %v1564
      %v1659 = vadd.f32 %v1339, %v1566
      %v1660 = vadd.f32 %v1340, %v1568
      %v1661 = vadd.f32 %v1341, %v1570
      %v1662 = vadd.f32 %v1342, %v1572
      %v1663 = vadd.f32 %v1343, %v1574
      %v1664 = vadd.f32 %v1344, %v1576
      %v1665 = vadd.f32 %v1345, %v1578
      %v1666 = vadd.f32 %v1346, %v1580
      %v1667 = vadd.f32 %v1347, %v1582
      %v1668 = vadd.f32 %v1348, %v1584
      %v1669 = vadd.f32 %v1349, %v1586
      %v1670 = vadd.f32 %v1350, %v1588
      %v1671 = vadd.f32 %v1351, %v1590
      %v1672 = vadd.f32 %v1352, %v1592
      %v1673 = vadd.f32 %v1353, %v1594
      %v1674 = vadd.f32 %v1354, %v1596
      %v1675 = vadd.f32 %v1355, %v1598
      %v1676 = vadd.f32 %v1356, %v1600
      %v1677 = vadd.f32 %v1357, %v1602
      %v1678 = vadd.f32 %v1358, %v1604
      %v1679 = vadd.f32 %v1359, %v1606
      %v1680 = vadd.f32 %v1360, %v1608
      %v1681 = vadd.f32 %v1361, %v1610
      %v1682 = vadd.f32 %v1362, %v1612
      %v1683 = vadd.f32 %v1363, %v1614
      %v1684 = vadd.f32 %v1364, %v1616
      %v1685 = vadd.f32 %v1365, %v1618
      %v1686 = vadd.f32 %v1366, %v1620
      %v1687 = vadd.f32 %v1367, %v1622
      %v1688 = vadd.f32 %v1368, %v1624
      %v1689 = vtanh.pop %v1657
      %v1690 = vtanh.pop %v1658
      %v1691 = vtanh.pop %v1659
      %v1692 = vtanh.pop %v1660
      %v1693 = vtanh.pop %v1661
      %v1694 = vtanh.pop %v1662
      %v1695 = vtanh.pop %v1663
      %v1696 = vtanh.pop %v1664
      %v1697 = vtanh.pop %v1665
      %v1698 = vtanh.pop %v1666
      %v1699 = vtanh.pop %v1667
      %v1700 = vtanh.pop %v1668
      %v1701 = vtanh.pop %v1669
      %v1702 = vtanh.pop %v1670
      %v1703 = vtanh.pop %v1671
      %v1704 = vtanh.pop %v1672
      %v1705 = vtanh.pop %v1673
      %v1706 = vtanh.pop %v1674
      %v1707 = vtanh.pop %v1675
      %v1708 = vtanh.pop %v1676
      %v1709 = vtanh.pop %v1677
      %v1710 = vtanh.pop %v1678
      %v1711 = vtanh.pop %v1679
      %v1712 = vtanh.pop %v1680
      %v1713 = vtanh.pop %v1681
      %v1714 = vtanh.pop %v1682
      %v1715 = vtanh.pop %v1683
      %v1716 = vtanh.pop %v1684
      %v1717 = vtanh.pop %v1685
      %v1718 = vtanh.pop %v1686
      %v1719 = vtanh.pop %v1687
      %v1720 = vtanh.pop %v1688
      %1753 = vrot.lane.b32.xlu0 %v1689, 32
      %v1754 = vpop.permute.xlu0 %1753
      %1755 = vrot.lane.b32.xlu0 %v1690, 32
      %v1756 = vpop.permute.xlu0 %1755
      %1757 = vrot.lane.b32.xlu0 %v1691, 32
      %v1758 = vpop.permute.xlu0 %1757
      %1759 = vrot.lane.b32.xlu0 %v1692, 32
      %v1760 = vpop.permute.xlu0 %1759
      %1761 = vrot.lane.b32.xlu0 %v1693, 32
      %v1762 = vpop.permute.xlu0 %1761
      %1763 = vrot.lane.b32.xlu0 %v1694, 32
      %v1764 = vpop.permute.xlu0 %1763
      %1765 = vrot.lane.b32.xlu0 %v1695, 32
      %v1766 = vpop.permute.xlu0 %1765
      %1767 = vrot.lane.b32.xlu0 %v1696, 32
      %v1768 = vpop.permute.xlu0 %1767
      %1769 = vrot.lane.b32.xlu0 %v1697, 32
      %v1770 = vpop.permute.xlu0 %1769
      %1771 = vrot.lane.b32.xlu0 %v1698, 32
      %v1772 = vpop.permute.xlu0 %1771
      %1773 = vrot.lane.b32.xlu0 %v1699, 32
      %v1774 = vpop.permute.xlu0 %1773
      %1775 = vrot.lane.b32.xlu0 %v1700, 32
      %v1776 = vpop.permute.xlu0 %1775
      %1777 = vrot.lane.b32.xlu0 %v1701, 32
      %v1778 = vpop.permute.xlu0 %1777
      %1779 = vrot.lane.b32.xlu0 %v1702, 32
      %v1780 = vpop.permute.xlu0 %1779
      %1781 = vrot.lane.b32.xlu0 %v1703, 32
      %v1782 = vpop.permute.xlu0 %1781
      %1783 = vrot.lane.b32.xlu0 %v1704, 32
      %v1784 = vpop.permute.xlu0 %1783
      %1785 = vrot.lane.b32.xlu0 %v1705, 32
      %v1786 = vpop.permute.xlu0 %1785
      %1787 = vrot.lane.b32.xlu0 %v1706, 32
      %v1788 = vpop.permute.xlu0 %1787
      %1789 = vrot.lane.b32.xlu0 %v1707, 32
      %v1790 = vpop.permute.xlu0 %1789
      %1791 = vrot.lane.b32.xlu0 %v1708, 32
      %v1792 = vpop.permute.xlu0 %1791
      %1793 = vrot.lane.b32.xlu0 %v1709, 32
      %v1794 = vpop.permute.xlu0 %1793
      %1795 = vrot.lane.b32.xlu0 %v1710, 32
      %v1796 = vpop.permute.xlu0 %1795
      %1797 = vrot.lane.b32.xlu0 %v1711, 32
      %v1798 = vpop.permute.xlu0 %1797
      %1799 = vrot.lane.b32.xlu0 %v1712, 32
      %v1800 = vpop.permute.xlu0 %1799
      %1801 = vrot.lane.b32.xlu0 %v1713, 32
      %v1802 = vpop.permute.xlu0 %1801
      %1803 = vrot.lane.b32.xlu0 %v1714, 32
      %v1804 = vpop.permute.xlu0 %1803
      %1805 = vrot.lane.b32.xlu0 %v1715, 32
      %v1806 = vpop.permute.xlu0 %1805
      %1807 = vrot.lane.b32.xlu0 %v1716, 32
      %v1808 = vpop.permute.xlu0 %1807
      %1809 = vrot.lane.b32.xlu0 %v1717, 32
      %v1810 = vpop.permute.xlu0 %1809
      %1811 = vrot.lane.b32.xlu0 %v1718, 32
      %v1812 = vpop.permute.xlu0 %1811
      %1813 = vrot.lane.b32.xlu0 %v1719, 32
      %v1814 = vpop.permute.xlu0 %1813
      %1815 = vrot.lane.b32.xlu0 %v1720, 32
      %v1816 = vpop.permute.xlu0 %1815
      %v1849 = vmul.f32 %v1082, %v1754
      %v1850 = vmul.f32 %v1084, %v1756
      %v1851 = vmul.f32 %v1086, %v1758
      %v1852 = vmul.f32 %v1088, %v1760
      %v1853 = vmul.f32 %v1090, %v1762
      %v1854 = vmul.f32 %v1092, %v1764
      %v1855 = vmul.f32 %v1094, %v1766
      %v1856 = vmul.f32 %v1096, %v1768
      %v1857 = vmul.f32 %v1098, %v1770
      %v1858 = vmul.f32 %v1100, %v1772
      %v1859 = vmul.f32 %v1102, %v1774
      %v1860 = vmul.f32 %v1104, %v1776
      %v1861 = vmul.f32 %v1106, %v1778
      %v1862 = vmul.f32 %v1108, %v1780
      %v1863 = vmul.f32 %v1110, %v1782
      %v1864 = vmul.f32 %v1112, %v1784
      %v1865 = vmul.f32 %v1114, %v1786
      %v1866 = vmul.f32 %v1116, %v1788
      %v1867 = vmul.f32 %v1118, %v1790
      %v1868 = vmul.f32 %v1120, %v1792
      %v1869 = vmul.f32 %v1122, %v1794
      %v1870 = vmul.f32 %v1124, %v1796
      %v1871 = vmul.f32 %v1126, %v1798
      %v1872 = vmul.f32 %v1128, %v1800
      %v1873 = vmul.f32 %v1130, %v1802
      %v1874 = vmul.f32 %v1132, %v1804
      %v1875 = vmul.f32 %v1134, %v1806
      %v1876 = vmul.f32 %v1136, %v1808
      %v1877 = vmul.f32 %v1138, %v1810
      %v1878 = vmul.f32 %v1140, %v1812
      %v1879 = vmul.f32 %v1142, %v1814
      %v1880 = vmul.f32 %v1144, %v1816
      %1913 = vrot.lane.b32.xlu0 %v1849, 64
      %v1914 = vpop.permute.xlu0 %1913
      %1915 = vrot.lane.b32.xlu0 %v1850, 64
      %v1916 = vpop.permute.xlu0 %1915
      %1917 = vrot.lane.b32.xlu0 %v1851, 64
      %v1918 = vpop.permute.xlu0 %1917
      %1919 = vrot.lane.b32.xlu0 %v1852, 64
      %v1920 = vpop.permute.xlu0 %1919
      %1921 = vrot.lane.b32.xlu0 %v1853, 64
      %v1922 = vpop.permute.xlu0 %1921
      %1923 = vrot.lane.b32.xlu0 %v1854, 64
      %v1924 = vpop.permute.xlu0 %1923
      %1925 = vrot.lane.b32.xlu0 %v1855, 64
      %v1926 = vpop.permute.xlu0 %1925
      %1927 = vrot.lane.b32.xlu0 %v1856, 64
      %v1928 = vpop.permute.xlu0 %1927
      %1929 = vrot.lane.b32.xlu0 %v1857, 64
      %v1930 = vpop.permute.xlu0 %1929
      %1931 = vrot.lane.b32.xlu0 %v1858, 64
      %v1932 = vpop.permute.xlu0 %1931
      %1933 = vrot.lane.b32.xlu0 %v1859, 64
      %v1934 = vpop.permute.xlu0 %1933
      %1935 = vrot.lane.b32.xlu0 %v1860, 64
      %v1936 = vpop.permute.xlu0 %1935
      %1937 = vrot.lane.b32.xlu0 %v1861, 64
      %v1938 = vpop.permute.xlu0 %1937
      %1939 = vrot.lane.b32.xlu0 %v1862, 64
      %v1940 = vpop.permute.xlu0 %1939
      %1941 = vrot.lane.b32.xlu0 %v1863, 64
      %v1942 = vpop.permute.xlu0 %1941
      %1943 = vrot.lane.b32.xlu0 %v1864, 64
      %v1944 = vpop.permute.xlu0 %1943
      %1945 = vrot.lane.b32.xlu0 %v1865, 64
      %v1946 = vpop.permute.xlu0 %1945
      %1947 = vrot.lane.b32.xlu0 %v1866, 64
      %v1948 = vpop.permute.xlu0 %1947
      %1949 = vrot.lane.b32.xlu0 %v1867, 64
      %v1950 = vpop.permute.xlu0 %1949
      %1951 = vrot.lane.b32.xlu0 %v1868, 64
      %v1952 = vpop.permute.xlu0 %1951
      %1953 = vrot.lane.b32.xlu0 %v1869, 64
      %v1954 = vpop.permute.xlu0 %1953
      %1955 = vrot.lane.b32.xlu0 %v1870, 64
      %v1956 = vpop.permute.xlu0 %1955
      %1957 = vrot.lane.b32.xlu0 %v1871, 64
      %v1958 = vpop.permute.xlu0 %1957
      %1959 = vrot.lane.b32.xlu0 %v1872, 64
      %v1960 = vpop.permute.xlu0 %1959
      %1961 = vrot.lane.b32.xlu0 %v1873, 64
      %v1962 = vpop.permute.xlu0 %1961
      %1963 = vrot.lane.b32.xlu0 %v1874, 64
      %v1964 = vpop.permute.xlu0 %1963
      %1965 = vrot.lane.b32.xlu0 %v1875, 64
      %v1966 = vpop.permute.xlu0 %1965
      %1967 = vrot.lane.b32.xlu0 %v1876, 64
      %v1968 = vpop.permute.xlu0 %1967
      %1969 = vrot.lane.b32.xlu0 %v1877, 64
      %v1970 = vpop.permute.xlu0 %1969
      %1971 = vrot.lane.b32.xlu0 %v1878, 64
      %v1972 = vpop.permute.xlu0 %1971
      %1973 = vrot.lane.b32.xlu0 %v1879, 64
      %v1974 = vpop.permute.xlu0 %1973
      %1975 = vrot.lane.b32.xlu0 %v1880, 64
      %v1976 = vpop.permute.xlu0 %1975
      %vm2009 = vcmask 261120
      %2010 = vst.msk [vmem:[%s252] sm:$0xff] %vm2009, %v1914
      %2011 = vst.msk [vmem:[%s252 + $0x8] sm:$0xff] %vm2009, %v1916
      %2012 = vst.msk [vmem:[%s252 + $0x10] sm:$0xff] %vm2009, %v1918
      %2013 = vst.msk [vmem:[%s252 + $0x18] sm:$0xff] %vm2009, %v1920
      %2014 = vst.msk [vmem:[%s252 + $0x20] sm:$0xff] %vm2009, %v1922
      %2015 = vst.msk [vmem:[%s252 + $0x28] sm:$0xff] %vm2009, %v1924
      %2016 = vst.msk [vmem:[%s252 + $0x30] sm:$0xff] %vm2009, %v1926
      %2017 = vst.msk [vmem:[%s252 + $0x38] sm:$0xff] %vm2009, %v1928
      %2018 = vst.msk [vmem:[%s252 + $0x40] sm:$0xff] %vm2009, %v1930
      %2019 = vst.msk [vmem:[%s252 + $0x48] sm:$0xff] %vm2009, %v1932
      %2020 = vst.msk [vmem:[%s252 + $0x50] sm:$0xff] %vm2009, %v1934
      %2021 = vst.msk [vmem:[%s252 + $0x58] sm:$0xff] %vm2009, %v1936
      %2022 = vst.msk [vmem:[%s252 + $0x60] sm:$0xff] %vm2009, %v1938
      %2023 = vst.msk [vmem:[%s252 + $0x68] sm:$0xff] %vm2009, %v1940
      %2024 = vst.msk [vmem:[%s252 + $0x70] sm:$0xff] %vm2009, %v1942
      %2025 = vst.msk [vmem:[%s252 + $0x78] sm:$0xff] %vm2009, %v1944
      %2026 = vst.msk [vmem:[%s252 + $0x80] sm:$0xff] %vm2009, %v1946
      %2027 = vst.msk [vmem:[%s252 + $0x88] sm:$0xff] %vm2009, %v1948
      %2028 = vst.msk [vmem:[%s252 + $0x90] sm:$0xff] %vm2009, %v1950
      %2029 = vst.msk [vmem:[%s252 + $0x98] sm:$0xff] %vm2009, %v1952
      %2030 = vst.msk [vmem:[%s252 + $0xa0] sm:$0xff] %vm2009, %v1954
      %2031 = vst.msk [vmem:[%s252 + $0xa8] sm:$0xff] %vm2009, %v1956
      %2032 = vst.msk [vmem:[%s252 + $0xb0] sm:$0xff] %vm2009, %v1958
      %2033 = vst.msk [vmem:[%s252 + $0xb8] sm:$0xff] %vm2009, %v1960
      %2034 = vst.msk [vmem:[%s252 + $0xc0] sm:$0xff] %vm2009, %v1962
      %2035 = vst.msk [vmem:[%s252 + $0xc8] sm:$0xff] %vm2009, %v1964
      %2036 = vst.msk [vmem:[%s252 + $0xd0] sm:$0xff] %vm2009, %v1966
      %2037 = vst.msk [vmem:[%s252 + $0xd8] sm:$0xff] %vm2009, %v1968
      %2038 = vst.msk [vmem:[%s252 + $0xe0] sm:$0xff] %vm2009, %v1970
      %2039 = vst.msk [vmem:[%s252 + $0xe8] sm:$0xff] %vm2009, %v1972
      %2040 = vst.msk [vmem:[%s252 + $0xf0] sm:$0xff] %vm2009, %v1974
      %2041 = vst.msk [vmem:[%s252 + $0xf8] sm:$0xff] %vm2009, %v1976
      %2074 = vrot.lane.b32.xlu0 %v1657, 96
      %v2075 = vpop.permute.xlu0 %2074
      %2076 = vrot.lane.b32.xlu0 %v1658, 96
      %v2077 = vpop.permute.xlu0 %2076
      %2078 = vrot.lane.b32.xlu0 %v1659, 96
      %v2079 = vpop.permute.xlu0 %2078
      %2080 = vrot.lane.b32.xlu0 %v1660, 96
      %v2081 = vpop.permute.xlu0 %2080
      %2082 = vrot.lane.b32.xlu0 %v1661, 96
      %v2083 = vpop.permute.xlu0 %2082
      %2084 = vrot.lane.b32.xlu0 %v1662, 96
      %v2085 = vpop.permute.xlu0 %2084
      %2086 = vrot.lane.b32.xlu0 %v1663, 96
      %v2087 = vpop.permute.xlu0 %2086
      %2088 = vrot.lane.b32.xlu0 %v1664, 96
      %v2089 = vpop.permute.xlu0 %2088
      %2090 = vrot.lane.b32.xlu0 %v1665, 96
      %v2091 = vpop.permute.xlu0 %2090
      %2092 = vrot.lane.b32.xlu0 %v1666, 96
      %v2093 = vpop.permute.xlu0 %2092
      %2094 = vrot.lane.b32.xlu0 %v1667, 96
      %v2095 = vpop.permute.xlu0 %2094
      %2096 = vrot.lane.b32.xlu0 %v1668, 96
      %v2097 = vpop.permute.xlu0 %2096
      %2098 = vrot.lane.b32.xlu0 %v1669, 96
      %v2099 = vpop.permute.xlu0 %2098
      %2100 = vrot.lane.b32.xlu0 %v1670, 96
      %v2101 = vpop.permute.xlu0 %2100
      %2102 = vrot.lane.b32.xlu0 %v1671, 96
      %v2103 = vpop.permute.xlu0 %2102
      %2104 = vrot.lane.b32.xlu0 %v1672, 96
      %v2105 = vpop.permute.xlu0 %2104
      %2106 = vrot.lane.b32.xlu0 %v1673, 96
      %v2107 = vpop.permute.xlu0 %2106
      %2108 = vrot.lane.b32.xlu0 %v1674, 96
      %v2109 = vpop.permute.xlu0 %2108
      %2110 = vrot.lane.b32.xlu0 %v1675, 96
      %v2111 = vpop.permute.xlu0 %2110
      %2112 = vrot.lane.b32.xlu0 %v1676, 96
      %v2113 = vpop.permute.xlu0 %2112
      %2114 = vrot.lane.b32.xlu0 %v1677, 96
      %v2115 = vpop.permute.xlu0 %2114
      %2116 = vrot.lane.b32.xlu0 %v1678, 96
      %v2117 = vpop.permute.xlu0 %2116
      %2118 = vrot.lane.b32.xlu0 %v1679, 96
      %v2119 = vpop.permute.xlu0 %2118
      %2120 = vrot.lane.b32.xlu0 %v1680, 96
      %v2121 = vpop.permute.xlu0 %2120
      %2122 = vrot.lane.b32.xlu0 %v1681, 96
      %v2123 = vpop.permute.xlu0 %2122
      %2124 = vrot.lane.b32.xlu0 %v1682, 96
      %v2125 = vpop.permute.xlu0 %2124
      %2126 = vrot.lane.b32.xlu0 %v1683, 96
      %v2127 = vpop.permute.xlu0 %2126
      %2128 = vrot.lane.b32.xlu0 %v1684, 96
      %v2129 = vpop.permute.xlu0 %2128
      %2130 = vrot.lane.b32.xlu0 %v1685, 96
      %v2131 = vpop.permute.xlu0 %2130
      %2132 = vrot.lane.b32.xlu0 %v1686, 96
      %v2133 = vpop.permute.xlu0 %2132
      %2134 = vrot.lane.b32.xlu0 %v1687, 96
      %v2135 = vpop.permute.xlu0 %2134
      %2136 = vrot.lane.b32.xlu0 %v1688, 96
      %v2137 = vpop.permute.xlu0 %2136
      %2170 = vst.msk [vmem:[%s257] sm:$0xff] %vm2009, %v2075
      %2171 = vst.msk [vmem:[%s257 + $0x8] sm:$0xff] %vm2009, %v2077
      %2172 = vst.msk [vmem:[%s257 + $0x10] sm:$0xff] %vm2009, %v2079
      %2173 = vst.msk [vmem:[%s257 + $0x18] sm:$0xff] %vm2009, %v2081
      %2174 = vst.msk [vmem:[%s257 + $0x20] sm:$0xff] %vm2009, %v2083
      %2175 = vst.msk [vmem:[%s257 + $0x28] sm:$0xff] %vm2009, %v2085
      %2176 = vst.msk [vmem:[%s257 + $0x30] sm:$0xff] %vm2009, %v2087
      %2177 = vst.msk [vmem:[%s257 + $0x38] sm:$0xff] %vm2009, %v2089
      %2178 = vst.msk [vmem:[%s257 + $0x40] sm:$0xff] %vm2009, %v2091
      %2179 = vst.msk [vmem:[%s257 + $0x48] sm:$0xff] %vm2009, %v2093
      %2180 = vst.msk [vmem:[%s257 + $0x50] sm:$0xff] %vm2009, %v2095
      %2181 = vst.msk [vmem:[%s257 + $0x58] sm:$0xff] %vm2009, %v2097
      %2182 = vst.msk [vmem:[%s257 + $0x60] sm:$0xff] %vm2009, %v2099
      %2183 = vst.msk [vmem:[%s257 + $0x68] sm:$0xff] %vm2009, %v2101
      %2184 = vst.msk [vmem:[%s257 + $0x70] sm:$0xff] %vm2009, %v2103
      %2185 = vst.msk [vmem:[%s257 + $0x78] sm:$0xff] %vm2009, %v2105
      %2186 = vst.msk [vmem:[%s257 + $0x80] sm:$0xff] %vm2009, %v2107
      %2187 = vst.msk [vmem:[%s257 + $0x88] sm:$0xff] %vm2009, %v2109
      %2188 = vst.msk [vmem:[%s257 + $0x90] sm:$0xff] %vm2009, %v2111
      %2189 = vst.msk [vmem:[%s257 + $0x98] sm:$0xff] %vm2009, %v2113
      %2190 = vst.msk [vmem:[%s257 + $0xa0] sm:$0xff] %vm2009, %v2115
      %2191 = vst.msk [vmem:[%s257 + $0xa8] sm:$0xff] %vm2009, %v2117
      %2192 = vst.msk [vmem:[%s257 + $0xb0] sm:$0xff] %vm2009, %v2119
      %2193 = vst.msk [vmem:[%s257 + $0xb8] sm:$0xff] %vm2009, %v2121
      %2194 = vst.msk [vmem:[%s257 + $0xc0] sm:$0xff] %vm2009, %v2123
      %2195 = vst.msk [vmem:[%s257 + $0xc8] sm:$0xff] %vm2009, %v2125
      %2196 = vst.msk [vmem:[%s257 + $0xd0] sm:$0xff] %vm2009, %v2127
      %2197 = vst.msk [vmem:[%s257 + $0xd8] sm:$0xff] %vm2009, %v2129
      %2198 = vst.msk [vmem:[%s257 + $0xe0] sm:$0xff] %vm2009, %v2131
      %2199 = vst.msk [vmem:[%s257 + $0xe8] sm:$0xff] %vm2009, %v2133
      %2200 = vst.msk [vmem:[%s257 + $0xf0] sm:$0xff] %vm2009, %v2135
      %2201 = vst.msk [vmem:[%s257 + $0xf8] sm:$0xff] %vm2009, %v2137
      %p2202 = scmp.lt.s32.totalorder %s17, 1
      %s2203 = scalar_select %p2202, %s17, 1
      %s2204 = smul.addr %s2203, 32
      %s2205 = smul.addr %s2204, 8
      %s2206 = scalar_lea.vmem %s4, %s2205
      %p2207 = scmp.lt.s32.totalorder %s17, 1
      %s2208 = scalar_select %p2207, %s17, 1
      %s2209 = smul.addr %s2208, 32
      %s2210 = smul.addr %s2209, 8
      %s2211 = scalar_lea.vmem %s5, %s2210
      // Predicated region
      $region37: #{tpu_custom_call.1} parent=35 // pred_check
        %p2212 = pneg %p129
      $region38: #{tpu_custom_call.1} parent=35 // pred_check_branch
        %2214 = sbr.rel (%p2212) target = $region40
      $region39: #{tpu_custom_call.1} parent=35 // pred_region
        _
      $region40: #{tpu_custom_call.1} parent=35 // pred_fallthru
        _
      // Predicated region
      $region41: #{tpu_custom_call.1} parent=35 // pred_check
        %p2215 = pneg %p155
      $region42: #{tpu_custom_call.1} parent=35 // pred_check_branch
        %2217 = sbr.rel (%p2215) target = $region44
      $region43: #{tpu_custom_call.1} parent=35 // pred_region
        _
      $region44: #{tpu_custom_call.1} parent=35 // pred_fallthru
        _
    $region36: #{tpu_custom_call.1} parent=5 // pred_fallthru
      _
    %p2218 = scmp.le.s32.totalorder 2, %s12
    // Predicated region
    $region45: #{tpu_custom_call.1} parent=5 // pred_check
      %p2219 = pneg %p2218
    $region46: #{tpu_custom_call.1} parent=5 // pred_check_branch
      %2221 = sbr.rel (%p2219) target = $region48
    $region47: #{tpu_custom_call.1} parent=5 // pred_region
      %s2222 = ssub.s32 %s12, 2
      // Predicated region
      $region49: #{tpu_custom_call.1} parent=47 // pred_check
        %p2223 = pneg %p135
      $region50: #{tpu_custom_call.1} parent=47 // pred_check_branch
        %2225 = sbr.rel (%p2223) target = $region52
      $region51: #{tpu_custom_call.1} parent=47 // pred_region
        %p2226 = scmp.lt.s32.totalorder %s18, 1
        %s2227 = scalar_select %p2226, %s18, 1
        %s2228 = smul.addr %s2227, 32
        %s2229 = smul.addr %s2228, 8
        %s2230 = scalar_lea.vmem %s4, %s2229
      $region52: #{tpu_custom_call.1} parent=47 // pred_fallthru
        _
      // Predicated region
      $region53: #{tpu_custom_call.1} parent=47 // pred_check
        %p2231 = pneg %p161
      $region54: #{tpu_custom_call.1} parent=47 // pred_check_branch
        %2233 = sbr.rel (%p2231) target = $region56
      $region55: #{tpu_custom_call.1} parent=47 // pred_region
        %p2234 = scmp.lt.s32.totalorder %s18, 1
        %s2235 = scalar_select %p2234, %s18, 1
        %s2236 = smul.addr %s2235, 32
        %s2237 = smul.addr %s2236, 8
        %s2238 = scalar_lea.vmem %s5, %s2237
      $region56: #{tpu_custom_call.1} parent=47 // pred_fallthru
        _
    $region48: #{tpu_custom_call.1} parent=5 // pred_fallthru
      _
  $region6: #{tpu_custom_call.1} parent=0 // loop_footer
    %s16 = sadd.s32 1, %s12
  $region7: #{tpu_custom_call.1} parent=0 // loop_footer_branch
    %11 = sbr.rel target = $region3
  $region8: #{tpu_custom_call.1} parent=0 // loop_exit
    _

</llo_original>
